<compile_context>
chip_gen: v7x
topology: tpu7x:2x2x1
jax: 0.10.0
libtpu: 0.0.40
codegen_flags: <defaults>
</compile_context>

<pallas_src>
import functools

import jax
import jax.numpy as jnp
from jax.experimental import pallas as pl
from jax.experimental.pallas import tpu as pltpu

ALPHA = 0.25          # focal alpha (both losses)
EPS_NORM_SQ = 1e-24   # clamp on squared L2 norm (eps ~1e-12 on the norm)


def _round_up(x, m):
    return ((x + m - 1) // m) * m


# ----------------------------------------------------------------------------
# Kernel 1: dual-softmax focal loss (diagonal-only, single-exp, log-space)
# ----------------------------------------------------------------------------
def _dual_softmax_kernel(x_ref, y_ref, loss_ref, csum_scr, rp_scr, *, temp, n_real):
    i = pl.program_id(0)
    nblk = pl.num_programs(0)
    tm = x_ref.shape[0]
    n = y_ref.shape[0]

    @pl.when(i == 0)
    def _init():
        csum_scr[...] = jnp.zeros_like(csum_scr)
        rp_scr[...] = jnp.zeros_like(rp_scr)
        loss_ref[0, 0] = jnp.float32(0.0)

    # similarity block on the MXU (bf16 operands, f32 accumulation), no transpose
    s = jax.lax.dot_general(
        x_ref[...], y_ref[...],
        dimension_numbers=(((1,), (1,)), ((), ())),
        preferred_element_type=jnp.float32) * temp             # (tm, n) f32

    row0 = i * tm
    row_ids = row0 + jax.lax.broadcasted_iota(jnp.int32, (tm, n), 0)
    col_ids = jax.lax.broadcasted_iota(jnp.int32, (tm, n), 1)

    # Single exp pass (static shift): unit-norm inputs => |s| <= temp, so
    # exp(s - temp) never overflows and a whole row/col never underflows to 0.
    e = jnp.exp(s - temp)                                      # (tm, n)
    diag_mask = col_ids == row_ids
    if n_real != n:                                            # static pad masking
        valid = jnp.logical_and(row_ids < n_real, col_ids < n_real)
        e = jnp.where(valid, e, 0.0)
        diag_mask = jnp.logical_and(diag_mask, col_ids < n_real)

    # running column sum-exp, lane-major (pure elementwise accumulate)
    csum_scr[...] += jnp.sum(e, axis=0, keepdims=True)         # (1, n)

    # row LSE completes within this block
    rowlse = temp + jnp.log(jnp.maximum(
        jnp.sum(e, axis=-1, keepdims=True), 1e-30))            # (tm, 1)

    # rowpart_i = 2*s_ii - rowLSE_i, scattered lane-major to lane i via the
    # diagonal mask (no transpose, no sub-lane-width HBM stores).
    rp_scr[...] += jnp.sum(jnp.where(diag_mask, 2.0 * s - rowlse, 0.0),
                           axis=0, keepdims=True)              # (1, n)

    @pl.when(i == nblk - 1)
    def _fin():
        col_lse = temp + jnp.log(jnp.maximum(csum_scr[...], 1e-30))    # (1, n)
        log_pos = jnp.minimum(rp_scr[...] - col_lse, 0.0)              # log P_ii
        pos = jnp.exp(log_pos)
        focal = -ALPHA * (1.0 - pos) * (1.0 - pos) * log_pos
        if n_real != n:
            lane_valid = jax.lax.broadcasted_iota(jnp.int32, (1, n), 1) < n_real
            focal = jnp.where(lane_valid, focal, 0.0)
        loss_ref[0, 0] = jnp.sum(focal) / n_real


def dual_softmax_loss_pallas(x, y, temp=20.0):
    assert x.ndim == 2 and x.shape == y.shape
    n, d = x.shape

    # normalize in f32 in the wrapper; kernel gets bf16 MXU-ready operands
    xf = x.astype(jnp.float32)
    yf = y.astype(jnp.float32)
    xn = xf * jax.lax.rsqrt(
        jnp.maximum(jnp.sum(xf * xf, axis=-1, keepdims=True), EPS_NORM_SQ))
    yn = yf * jax.lax.rsqrt(
        jnp.maximum(jnp.sum(yf * yf, axis=-1, keepdims=True), EPS_NORM_SQ))
    xb = xn.astype(jnp.bfloat16)
    yb = yn.astype(jnp.bfloat16)

    tm = 256
    n_pad = _round_up(n, tm)
    if n_pad != n:
        xb = jnp.pad(xb, ((0, n_pad - n), (0, 0)))
        yb = jnp.pad(yb, ((0, n_pad - n), (0, 0)))

    kernel = functools.partial(_dual_softmax_kernel, temp=float(temp), n_real=n)
    loss = pl.pallas_call(
        kernel,
        grid_spec=pltpu.PrefetchScalarGridSpec(
            num_scalar_prefetch=0,
            grid=(n_pad // tm,),
            in_specs=[
                pl.BlockSpec((tm, d), lambda i: (i, 0)),      # X: streamed row blocks
                pl.BlockSpec((n_pad, d), lambda i: (0, 0)),   # Y: resident bf16
            ],
            out_specs=pl.BlockSpec(memory_space=pltpu.MemorySpace.SMEM),
            scratch_shapes=[
                pltpu.VMEM((1, n_pad), jnp.float32),          # running col sum-exp
                pltpu.VMEM((1, n_pad), jnp.float32),          # 2*s_ii - rowLSE_i
            ],
        ),
        out_shape=jax.ShapeDtypeStruct((1, 1), jnp.float32),
        compiler_params=pltpu.CompilerParams(
            dimension_semantics=("arbitrary",),
            vmem_limit_bytes=32 * 1024 * 1024),
    )(xb, yb)
    return loss[0, 0]


# ----------------------------------------------------------------------------
# Kernel 2: fused heatmap focal-BCE loss + TP/FP for both images, lane-dense,
#           labels derived in-kernel from the SMEM keypoint table.
# ----------------------------------------------------------------------------
def _heatmap_kernel(lin_ref, k_ref, out_ref, lab_scr, *, kp):
    r = pl.program_id(0)
    nimg, tr, lanes = k_ref.shape

    @pl.when(r == 0)
    def _init():
        for im in range(nimg):
            out_ref[im, 0] = jnp.float32(0.0)
            out_ref[im, 1] = jnp.float32(0.0)
            out_ref[im, 2] = jnp.float32(0.0)

    # global linear pixel index of every element in this block
    base = r * (tr * lanes)
    lin_iota = (jax.lax.broadcasted_iota(jnp.int32, (tr, lanes), 0) * lanes
                + jax.lax.broadcasted_iota(jnp.int32, (tr, lanes), 1) + base)

    for im in range(nimg):                     # nimg == 2, static unroll
        k = k_ref[im].astype(jnp.float32)      # (tr, lanes) probabilities

        # label map for this block: only keypoints landing in the block's
        # linear-index range do any vector work.
        lab_scr[...] = jnp.zeros_like(lab_scr)

        @pl.loop(0, kp)
        def _(j):
            v = lin_ref[im * kp + j]

            @pl.when(jnp.logical_and(v >= base, v < base + tr * lanes))
            def _():
                lab_scr[...] = jnp.where(lin_iota == v, jnp.int32(1), lab_scr[...])

        is_pos = lab_scr[...] > 0

        # focal BCE: select first, log once (PyTorch's -100 log clamp)
        pt = jnp.where(is_pos, k, 1.0 - k)     # == exp(-bce) without the exp
        bce = jnp.minimum(-jnp.log(pt), 100.0)
        f_loss = ALPHA * (1.0 - pt) * (1.0 - pt) * bce

        pred = k > 0.5
        tp = jnp.sum(jnp.where(jnp.logical_and(pred, is_pos), 1.0, 0.0))
        fp = jnp.sum(jnp.where(jnp.logical_and(pred, jnp.logical_not(is_pos)),
                               1.0, 0.0))

        out_ref[im, 0] = out_ref[im, 0] + jnp.sum(f_loss)
        out_ref[im, 1] = out_ref[im, 1] + tp
        out_ref[im, 2] = out_ref[im, 2] + fp


def heatmap_losses_pallas(h1, h2, pts1, pts2):
    C, H, W = h1.shape
    assert C == 1 and h2.shape == h1.shape
    assert pts1.shape[0] == pts2.shape[0]
    hw = H * W

    # lane-dense layout with zero padding: (H*W) -> (rows, 128); zero-padded
    # pixels contribute exactly 0 loss / 0 TP / 0 FP so no mask is needed.
    lanes = 128
    rows0 = -(-hw // lanes)
    if rows0 > 512:
        tr = 512
        rows = _round_up(rows0, tr)
    else:
        tr = rows = rows0
    hw_pad = rows * lanes

    def _flat(h):
        v = h.reshape(-1)
        if hw_pad != hw:
            v = jnp.pad(v, (0, hw_pad - hw))
        return v.reshape(rows, lanes)

    k_all = jnp.stack([_flat(h1), _flat(h2)], axis=0)   # native dtype preserved

    kp = pts1.shape[0]
    lin_all = jnp.concatenate(
        [pts1[:, 1].astype(jnp.int32) * W + pts1[:, 0].astype(jnp.int32),
         pts2[:, 1].astype(jnp.int32) * W + pts2[:, 0].astype(jnp.int32)], axis=0)

    kernel = functools.partial(_heatmap_kernel, kp=kp)
    out = pl.pallas_call(
        kernel,
        grid_spec=pltpu.PrefetchScalarGridSpec(
            num_scalar_prefetch=1,
            grid=(rows // tr,),
            in_specs=[pl.BlockSpec((2, tr, lanes), lambda r, lin: (0, r, 0))],
            out_specs=pl.BlockSpec(memory_space=pltpu.MemorySpace.SMEM),
            scratch_shapes=[pltpu.VMEM((tr, lanes), jnp.int32)],   # block label map
        ),
        out_shape=jax.ShapeDtypeStruct((2, 3), jnp.float32),
        compiler_params=pltpu.CompilerParams(
            dimension_semantics=("arbitrary",),
            vmem_limit_bytes=32 * 1024 * 1024),
    )(lin_all, k_all)

    f_mean = out[:, 0] / float(hw)
    tp, fp = out[:, 1], out[:, 2]
    denom = tp + fp
    precision = jnp.where(denom > 0, tp / jnp.maximum(denom, 1.0), 0.0)
    return f_mean, precision


# ----------------------------------------------------------------------------
# DescriptorLoss wrapper (no learnable parameters)
# ----------------------------------------------------------------------------
class DescriptorLoss:
    def __init__(self, inv_temp=20, dual_softmax_weight=5, heatmap_weight=1):
        self.inv_temp = inv_temp
        self.dual_softmax_weight = dual_softmax_weight
        self.heatmap_weight = heatmap_weight

    def __call__(self, m1, m2, h1, h2, pts1, pts2):
        # reference forward() hardcodes temp=20 for the dual-softmax term
        loss_ds = dual_softmax_loss_pallas(m1, m2, temp=20.0) * self.dual_softmax_weight
        f_mean, precision = heatmap_losses_pallas(h1, h2, pts1, pts2)
        loss_h = (f_mean[0] + f_mean[1]) / 2.0 * self.heatmap_weight
        acc_kp = 0.5 * (precision[0] + precision[1])
        return loss_ds, loss_h, acc_kp


if __name__ == "__main__":
    key = jax.random.PRNGKey(0)
    k1, k2, k3, k4, k5, k6, k7, k8 = jax.random.split(key, 8)

    N, D = 512, 64      # descriptors (exercises the 2-block tiled path)
    H, W = 32, 32       # heatmap spatial size (lane-dense: (8, 128))
    K = 16              # keypoints per image

    m1 = jax.random.normal(k1, (N, D), jnp.float32)
    m2 = m1 + 0.1 * jax.random.normal(k2, (N, D), jnp.float32)

    h1 = jax.nn.sigmoid(jax.random.normal(k3, (1, H, W), jnp.float32))
    h2 = jax.nn.sigmoid(jax.random.normal(k4, (1, H, W), jnp.float32))

    pts1 = jnp.stack([jax.random.randint(k5, (K,), 0, W),
                      jax.random.randint(k6, (K,), 0, H)], axis=-1)
    pts2 = jnp.stack([jax.random.randint(k7, (K,), 0, W),
                      jax.random.randint(k8, (K,), 0, H)], axis=-1)

    loss_fn = DescriptorLoss()
    loss_ds, loss_h, acc_kp = loss_fn(m1, m2, h1, h2, pts1, pts2)
    jax.block_until_ready((loss_ds, loss_h, acc_kp))
    print("KERNEL_OK")
</pallas_src>

<mosaic_0001>
module attributes {stable_mosaic.version = 11 : i64} {
  func.func @_dual_softmax_kernel(%arg0: i32, %arg1: memref<256x64xbf16, #tpu.memory_space<vmem>>, %arg2: memref<512x64xbf16, #tpu.memory_space<vmem>>, %arg3: memref<1x1xf32, #tpu.memory_space<smem>>, %arg4: memref<1x512xf32, #tpu.memory_space<vmem>>, %arg5: memref<1x512xf32, #tpu.memory_space<vmem>>) attributes {dimension_semantics = [#tpu.dimension_semantics<arbitrary>], iteration_bounds = array<i64: 2>, scalar_prefetch = 0 : i64, scratch_operands = 2 : i64, tpu.core_type = #tpu.core_type<tc>, window_params = [{transform_indices = @transform_0, window_bounds = array<i64: 256, 64>}, {pipeline_mode = #tpu.pipeline_mode<synchronous>, transform_indices = @transform_1, window_bounds = array<i64: 512, 64>}, {transform_indices = @transform_2, window_bounds = array<i64: 1, 1>}]} {
    %c0_i32 = arith.constant 0 : i32
    %0 = arith.cmpi eq, %arg0, %c0_i32 : i32
    %1 = arith.extui %0 : i1 to i32
    %c0_i32_0 = arith.constant 0 : i32
    %2 = arith.cmpi ne, %1, %c0_i32_0 : i32
    scf.if %2 {
      %cst_22 = arith.constant 0.000000e+00 : f32
      %43 = vector.broadcast %cst_22 : f32 to vector<1x512xf32>
      %c0_23 = arith.constant 0 : index
      %c0_24 = arith.constant 0 : index
      %44 = vector.load %arg4[%c0_23, %c0_24] : memref<1x512xf32, #tpu.memory_space<vmem>>, vector<1x512xf32>
      tpu.vector_store %arg4[%c0_23, %c0_24], %43 {strides = array<i32>} : memref<1x512xf32, #tpu.memory_space<vmem>>, vector<1x512xf32>,
      %cst_25 = arith.constant 0.000000e+00 : f32
      %45 = vector.broadcast %cst_25 : f32 to vector<1x512xf32>
      %c0_26 = arith.constant 0 : index
      %c0_27 = arith.constant 0 : index
      %46 = vector.load %arg5[%c0_26, %c0_27] : memref<1x512xf32, #tpu.memory_space<vmem>>, vector<1x512xf32>
      tpu.vector_store %arg5[%c0_26, %c0_27], %45 {strides = array<i32>} : memref<1x512xf32, #tpu.memory_space<vmem>>, vector<1x512xf32>,
      %cst_28 = arith.constant 0.000000e+00 : f32
      %c0_29 = arith.constant 0 : index
      %c0_30 = arith.constant 0 : index
      %47 = memref.load %arg3[%c0_29, %c0_30] : memref<1x1xf32, #tpu.memory_space<smem>>
      memref.store %cst_28, %arg3[%c0_29, %c0_30] : memref<1x1xf32, #tpu.memory_space<smem>>
    } else {
    }
    %c0 = arith.constant 0 : index
    %c0_1 = arith.constant 0 : index
    %3 = vector.load %arg1[%c0, %c0_1] : memref<256x64xbf16, #tpu.memory_space<vmem>>, vector<256x64xbf16>
    %c0_2 = arith.constant 0 : index
    %c0_3 = arith.constant 0 : index
    %4 = vector.load %arg2[%c0_2, %c0_3] : memref<512x64xbf16, #tpu.memory_space<vmem>>, vector<512x64xbf16>
    %cst = arith.constant dense<0.000000e+00> : vector<256x512xf32>
    %5 = tpu.matmul %3, %4, %cst {dimension_numbers = #tpu.dot_dimension_numbers<[1], [1], [0], [0], [0, 0, 1, 0], [], []>} : vector<256x64xbf16>, vector<512x64xbf16>, vector<256x512xf32> -> vector<256x512xf32>
    %cst_4 = arith.constant 2.000000e+01 : f32
    %6 = vector.broadcast %cst_4 : f32 to vector<256x512xf32>
    %7 = arith.mulf %5, %6 : vector<256x512xf32>
    %c256_i32 = arith.constant 256 : i32
    %8 = arith.muli %arg0, %c256_i32 : i32
    %9 = tpu.iota {dimensions = array<i32: 0>} : vector<256x512xi32>
    %10 = vector.broadcast %8 : i32 to vector<256x512xi32>
    %11 = arith.addi %10, %9 : vector<256x512xi32>
    %12 = tpu.iota {dimensions = array<i32: 1>} : vector<256x512xi32>
    %cst_5 = arith.constant 2.000000e+01 : f32
    %13 = vector.broadcast %cst_5 : f32 to vector<256x512xf32>
    %14 = arith.subf %7, %13 : vector<256x512xf32>
    %15 = math.exp %14 : vector<256x512xf32>
    %16 = arith.cmpi eq, %12, %11 : vector<256x512xi32>
    %c0_6 = arith.constant 0 : index
    %c0_7 = arith.constant 0 : index
    %17 = vector.load %arg4[%c0_6, %c0_7] : memref<1x512xf32, #tpu.memory_space<vmem>>, vector<1x512xf32>
    %cst_8 = arith.constant dense<0.000000e+00> : vector<512xf32>
    %18 = vector.multi_reduction <add>, %15, %cst_8 [0] : vector<256x512xf32> to vector<512xf32>
    %19 = vector.shape_cast %18 : vector<512xf32> to vector<1x512xf32>
    %20 = arith.addf %17, %19 : vector<1x512xf32>
    %c0_9 = arith.constant 0 : index
    %c0_10 = arith.constant 0 : index
    %21 = vector.load %arg4[%c0_9, %c0_10] : memref<1x512xf32, #tpu.memory_space<vmem>>, vector<1x512xf32>
    tpu.vector_store %arg4[%c0_9, %c0_10], %20 {strides = array<i32>} : memref<1x512xf32, #tpu.memory_space<vmem>>, vector<1x512xf32>,
    %cst_11 = arith.constant dense<0.000000e+00> : vector<256xf32>
    %22 = vector.multi_reduction <add>, %15, %cst_11 [1] : vector<256x512xf32> to vector<256xf32>
    %23 = vector.shape_cast %22 : vector<256xf32> to vector<256x1xf32>
    %cst_12 = arith.constant 1.000000e-30 : f32
    %24 = vector.broadcast %cst_12 : f32 to vector<256x1xf32>
    %25 = arith.maximumf %23, %24 : vector<256x1xf32>
    %26 = math.log %25 : vector<256x1xf32>
    %cst_13 = arith.constant 2.000000e+01 : f32
    %27 = vector.broadcast %cst_13 : f32 to vector<256x1xf32>
    %28 = arith.addf %27, %26 : vector<256x1xf32>
    %c0_14 = arith.constant 0 : index
    %c0_15 = arith.constant 0 : index
    %29 = vector.load %arg5[%c0_14, %c0_15] : memref<1x512xf32, #tpu.memory_space<vmem>>, vector<1x512xf32>
    %cst_16 = arith.constant 2.000000e+00 : f32
    %30 = vector.broadcast %cst_16 : f32 to vector<256x512xf32>
    %31 = arith.mulf %30, %7 : vector<256x512xf32>
    %32 = vector.broadcast %28 : vector<256x1xf32> to vector<256x512xf32>
    %33 = arith.subf %31, %32 : vector<256x512xf32>
    %cst_17 = arith.constant 0.000000e+00 : f32
    %34 = vector.broadcast %cst_17 : f32 to vector<256x512xf32>
    %35 = arith.select %16, %33, %34 : vector<256x512xi1>, vector<256x512xf32>
    %cst_18 = arith.constant dense<0.000000e+00> : vector<512xf32>
    %36 = vector.multi_reduction <add>, %35, %cst_18 [0] : vector<256x512xf32> to vector<512xf32>
    %37 = vector.shape_cast %36 : vector<512xf32> to vector<1x512xf32>
    %38 = arith.addf %29, %37 : vector<1x512xf32>
    %c0_19 = arith.constant 0 : index
    %c0_20 = arith.constant 0 : index
    %39 = vector.load %arg5[%c0_19, %c0_20] : memref<1x512xf32, #tpu.memory_space<vmem>>, vector<1x512xf32>
    tpu.vector_store %arg5[%c0_19, %c0_20], %38 {strides = array<i32>} : memref<1x512xf32, #tpu.memory_space<vmem>>, vector<1x512xf32>,
    %c1_i32 = arith.constant 1 : i32
    %40 = arith.cmpi eq, %arg0, %c1_i32 : i32
    %41 = arith.extui %40 : i1 to i32
    %c0_i32_21 = arith.constant 0 : i32
    %42 = arith.cmpi ne, %41, %c0_i32_21 : i32
    scf.if %42 {
      %c0_22 = arith.constant 0 : index
      %c0_23 = arith.constant 0 : index
      %43 = vector.load %arg4[%c0_22, %c0_23] : memref<1x512xf32, #tpu.memory_space<vmem>>, vector<1x512xf32>
      %cst_24 = arith.constant 1.000000e-30 : f32
      %44 = vector.broadcast %cst_24 : f32 to vector<1x512xf32>
      %45 = arith.maximumf %43, %44 : vector<1x512xf32>
      %46 = math.log %45 : vector<1x512xf32>
      %cst_25 = arith.constant 2.000000e+01 : f32
      %47 = vector.broadcast %cst_25 : f32 to vector<1x512xf32>
      %48 = arith.addf %47, %46 : vector<1x512xf32>
      %c0_26 = arith.constant 0 : index
      %c0_27 = arith.constant 0 : index
      %49 = vector.load %arg5[%c0_26, %c0_27] : memref<1x512xf32, #tpu.memory_space<vmem>>, vector<1x512xf32>
      %50 = arith.subf %49, %48 : vector<1x512xf32>
      %cst_28 = arith.constant 0.000000e+00 : f32
      %51 = vector.broadcast %cst_28 : f32 to vector<1x512xf32>
      %52 = arith.minimumf %50, %51 : vector<1x512xf32>
      %53 = math.exp %52 : vector<1x512xf32>
      %cst_29 = arith.constant 1.000000e+00 : f32
      %54 = vector.broadcast %cst_29 : f32 to vector<1x512xf32>
      %55 = arith.subf %54, %53 : vector<1x512xf32>
      %cst_30 = arith.constant -2.500000e-01 : f32
      %56 = vector.broadcast %cst_30 : f32 to vector<1x512xf32>
      %57 = arith.mulf %56, %55 : vector<1x512xf32>
      %cst_31 = arith.constant 1.000000e+00 : f32
      %58 = vector.broadcast %cst_31 : f32 to vector<1x512xf32>
      %59 = arith.subf %58, %53 : vector<1x512xf32>
      %60 = arith.mulf %57, %59 : vector<1x512xf32>
      %61 = arith.mulf %60, %52 : vector<1x512xf32>
      %62 = vector.shape_cast %61 : vector<1x512xf32> to vector<1x1x512xf32>
      %cst_32 = arith.constant dense<0.000000e+00> : vector<1xf32>
      %63 = vector.multi_reduction <add>, %62, %cst_32 [1, 2] : vector<1x1x512xf32> to vector<1xf32>
      %64 = vector.shape_cast %63 : vector<1xf32> to vector<1x1x1xf32>
      %65 = vector.extract %64[0, 0, 0] : f32 from vector<1x1x1xf32>
      %cst_33 = arith.constant 5.120000e+02 : f32
      %66 = arith.divf %65, %cst_33 : f32
      %c0_34 = arith.constant 0 : index
      %c0_35 = arith.constant 0 : index
      %67 = memref.load %arg3[%c0_34, %c0_35] : memref<1x1xf32, #tpu.memory_space<smem>>
      memref.store %66, %arg3[%c0_34, %c0_35] : memref<1x1xf32, #tpu.memory_space<smem>>
    } else {
    }
    return
  }
  func.func @transform_0(%arg0: i32) -> (i32, i32) {
    %c0_i32 = arith.constant 0 : i32
    %c0_i32_0 = arith.constant 0 : i32
    return %arg0, %c0_i32 : i32, i32
  }
  func.func @transform_1(%arg0: i32) -> (i32, i32) {
    %c0_i32 = arith.constant 0 : i32
    %c0_i32_0 = arith.constant 0 : i32
    %c0_i32_1 = arith.constant 0 : i32
    return %c0_i32, %c0_i32_0 : i32, i32
  }
  func.func @transform_2(%arg0: i32) -> (i32, i32) {
    %c0_i32 = arith.constant 0 : i32
    %c0_i32_0 = arith.constant 0 : i32
    %c0_i32_1 = arith.constant 0 : i32
    return %c0_i32, %c0_i32_0 : i32, i32
  }
}

</mosaic_0001>

<llo_original>
// kernel: tpu_custom_call.1
$region0: #{tpu_custom_call.1}
  #allocation0 [shape = 'u32[]', space=smem, size = 0x4, offset = 0x4, fixed_abs, tag = 'smem constant byte address 0x4 - core index']
  #allocation1 [shape = 'u32[144,128]{1,0:T(1,128)}', space=vmem, size = 0x12000, scoped, tag = 'internal scratch']
  #allocation2 [shape = 'f32[1,512]{1,0:T(1,128)}', space=vmem, size = 0x800, scoped, tag = 'scratch operand']
  #allocation3 [shape = 'f32[1,512]{1,0:T(1,128)}', space=vmem, size = 0x800, scoped, tag = 'scratch operand']
  %s0 = inlined_call_operand.vmem [shape: bf16[512,64], index: 0, kind: input, shape index: {}]
  %s1 = inlined_call_operand.vmem [shape: bf16[512,64], index: 1, kind: input, shape index: {}]
  %s2 = inlined_call_operand.hbm [shape: f32[1,1], index: 2, kind: output, shape index: {}]
  %s3 = sld [smem:[#allocation0]]
  $region49: #{tpu_custom_call.1} parent=0
    _
  %s5 = ssub.s32 1, %s3
  %s6 = scalar_select 0, %s5, %s3
  $region1: #{tpu_custom_call.1} parent=0
    #allocation4 [shape = 'u8[512]{0}', space=smem, size = 0x200, scoped, tag = 'output window, operand 0, single buffered']
    #allocation5 [shape = 's32[2]{0}', space=sflag, size = 0x8, scoped, tag = 'scoped memory for tpu_custom_call.1']
    %7 = vsyncpa [#allocation5], 0
    loop: start=0, step=1, limit=4
    $region2: #{tpu_custom_call.1} parent=1 // loop_pre_header
      _
    $region3: #{tpu_custom_call.1} parent=1 // loop_header
      %s9 = sphi 0, %s13
      %p10 = scmp.ge.s32.totalorder %s9, 4
      %s19 = sphi 0, %s21
      %s22 = sphi 0, %s19
      %s23 = sphi 0, %s22
      %s39 = sphi 0, %s23
      %s43 = sphi 0, %s43
      %s45 = sphi 0, %s43
      %s46 = sphi 0, %s45
      %s60 = sphi 0, %s46
      %s64 = sphi 0, %s64
      %s66 = sphi 0, %s64
      %s67 = sphi 0, %s66
      %s81 = sphi 0, %s67
    $region4: #{tpu_custom_call.1} parent=1 // loop_header_branch
      %12 = sbr.rel (%p10) target = $region8
    $region5: #{tpu_custom_call.1} parent=1 // loop_body
      %s14 = ssub.s32 %s9, 1
      %s15 = ssub.s32 %s9, 2
      %s16 = sadd.s32 %s9, 1
      %s17 = ssub.s32 %s9, %s16
      %p18 = scmp.eq.s32.totalorder %s17, 0
      %s20 = sadd.s32 %s19, 1
      %s21 = scalar_select %p18, %s19, %s20
      %p24 = pneg %p18
      %p25 = scmp.eq.s32.totalorder %s9, 1
      %p26 = por %p24, %p25
      %p27 = scmp.ne.s32.totalorder %s19, %s22
      %p28 = scmp.eq.s32.totalorder %s9, 0
      %p29 = por %p27, %p28
      %p30 = scmp.ne.s32.totalorder %s19, %s22
      %p31 = scmp.eq.s32.totalorder %s14, 1
      %p32 = por %p30, %p31
      %p33 = scmp.ne.s32.totalorder %s22, %s23
      %p34 = scmp.eq.s32.totalorder %s14, 0
      %p35 = por %p33, %p34
      %p36 = scmp.ne.s32.totalorder %s22, %s23
      %p37 = scmp.eq.s32.totalorder %s15, 1
      %p38 = por %p36, %p37
      %p40 = scmp.ne.s32.totalorder %s23, %s39
      %p41 = scmp.eq.s32.totalorder %s15, 0
      %p42 = por %p40, %p41
      %s44 = sadd.s32 %s43, 1
      %p47 = scmp.eq.s32.totalorder %s9, 1
      %p48 = scmp.ne.s32.totalorder %s43, %s45
      %p49 = scmp.eq.s32.totalorder %s9, 0
      %p50 = por %p48, %p49
      %p51 = scmp.ne.s32.totalorder %s43, %s45
      %p52 = scmp.eq.s32.totalorder %s14, 1
      %p53 = por %p51, %p52
      %p54 = scmp.ne.s32.totalorder %s45, %s46
      %p55 = scmp.eq.s32.totalorder %s14, 0
      %p56 = por %p54, %p55
      %p57 = scmp.ne.s32.totalorder %s45, %s46
      %p58 = scmp.eq.s32.totalorder %s15, 1
      %p59 = por %p57, %p58
      %p61 = scmp.ne.s32.totalorder %s46, %s60
      %p62 = scmp.eq.s32.totalorder %s15, 0
      %p63 = por %p61, %p62
      %s65 = sadd.s32 %s64, 1
      %p68 = scmp.eq.s32.totalorder %s9, 1
      %p69 = scmp.ne.s32.totalorder %s64, %s66
      %p70 = scmp.eq.s32.totalorder %s9, 0
      %p71 = por %p69, %p70
      %p72 = scmp.ne.s32.totalorder %s64, %s66
      %p73 = scmp.eq.s32.totalorder %s14, 1
      %p74 = por %p72, %p73
      %p75 = scmp.ne.s32.totalorder %s66, %s67
      %p76 = scmp.eq.s32.totalorder %s14, 0
      %p77 = por %p75, %p76
      %p78 = scmp.ne.s32.totalorder %s66, %s67
      %p79 = scmp.eq.s32.totalorder %s15, 1
      %p80 = por %p78, %p79
      %p82 = scmp.ne.s32.totalorder %s67, %s81
      %p83 = scmp.eq.s32.totalorder %s15, 0
      %p84 = por %p82, %p83
      %p85 = scmp.le.s32.totalorder 1, %s9
      %p86 = scmp.lt.s32.totalorder %s9, 3
      %p87 = pnand %p85, %p86
      %p88 = pneg %p87
      // Predicated region
      $region9: #{tpu_custom_call.1} parent=5 // pred_check
        _
      $region10: #{tpu_custom_call.1} parent=5 // pred_check_branch
        %90 = sbr.rel (%p87) target = $region12
      $region11: #{tpu_custom_call.1} parent=5 // pred_region
        %s91 = ssub.s32 %s9, 1
        // Predicated region
        $region13: #{tpu_custom_call.1} parent=11 // pred_check
          %p92 = pneg %p56
        $region14: #{tpu_custom_call.1} parent=11 // pred_check_branch
          %94 = sbr.rel (%p92) target = $region16
        $region15: #{tpu_custom_call.1} parent=11 // pred_region
          _
        $region16: #{tpu_custom_call.1} parent=11 // pred_fallthru
          _
      $region12: #{tpu_custom_call.1} parent=5 // pred_fallthru
        _
      %p95 = scmp.lt.s32.totalorder %s9, 2
      // Predicated region
      $region17: #{tpu_custom_call.1} parent=5 // pred_check
        %p96 = pneg %p95
      $region18: #{tpu_custom_call.1} parent=5 // pred_check_branch
        %98 = sbr.rel (%p96) target = $region20
      $region19: #{tpu_custom_call.1} parent=5 // pred_region
        // Predicated region
        $region21: #{tpu_custom_call.1} parent=19 // pred_check
          %p99 = pneg %p29
        $region22: #{tpu_custom_call.1} parent=19 // pred_check_branch
          %101 = sbr.rel (%p99) target = $region24
        $region23: #{tpu_custom_call.1} parent=19 // pred_region
          %s102 = smul.u32 32, %s9
          %p103 = scmp.lt.s32.totalorder %s102, 63
          %s104 = scalar_select %p103, %s102, 63
          %s105 = smul.addr %s104, 4
          %s106 = scalar_lea.vmem %s0, %s105
          %s107 = smul.u32 32, %s9
        $region24: #{tpu_custom_call.1} parent=19 // pred_fallthru
          _
      $region20: #{tpu_custom_call.1} parent=5 // pred_fallthru
        _
      %p108 = scmp.le.s32.totalorder 1, %s9
      %p109 = scmp.lt.s32.totalorder %s9, 3
      %p110 = pnand %p108, %p109
      %p111 = pneg %p110
      // Predicated region
      $region25: #{tpu_custom_call.1} parent=5 // pred_check
        _
      $region26: #{tpu_custom_call.1} parent=5 // pred_check_branch
        %113 = sbr.rel (%p110) target = $region28
      $region27: #{tpu_custom_call.1} parent=5 // pred_region
        %s114 = ssub.s32 %s9, 1
        %s115 = smul.u32 32, %s14
        %p116 = scmp.lt.s32.totalorder %s115, 63
        %s117 = scalar_select %p116, %s115, 63
        %s118 = smul.addr %s117, 4
        %s119 = scalar_lea.vmem %s0, %s118
        %p120 = pneg %p35
        %p121 = pneg %p32
        %p122 = pneg %p56
        %p123 = pneg %p53
        %p124 = pneg %p77
        %p125 = pneg %p74
        %s126 = smul.u32 32, %s14
        %p127 = scmp.lt.s32.totalorder %s126, 63
        %s128 = scalar_select %p127, %s126, 63
        %s129 = smul.addr %s128, 4
        %s130 = scalar_lea.vmem %s0, %s129
        %s131 = smul.u32 32, %s14
        %p133 = scmp.eq.s32.totalorder %s14, 0
        // Predicated region
        $region29: #{tpu_custom_call.1} parent=27 // pred_check
          %p134 = pneg %p133
        $region30: #{tpu_custom_call.1} parent=27 // pred_check_branch
          %136 = sbr.rel (%p134) target = $region32
        $region31: #{tpu_custom_call.1} parent=27 // pred_region
          %v137 = vlaneseq
          %vm138 = vcmp.ge.s32.totalorder %v137, 0
          %vm139 = vcmp.lt.s32.totalorder %v137, 512
          %vm140 = vmand %vm138, %vm139
          %141 = vst.msk [vmem:[#allocation2] sm:$0xf] %vm140, 0.0
          %142 = vst.msk [vmem:[#allocation3] sm:$0xf] %vm140, 0.0
          %s143 = scalar_lea.smem [#allocation4], 0
          %144 = sst [smem:[%s143]] 0.0
        $region32: #{tpu_custom_call.1} parent=27 // pred_fallthru
          _
        %v145 = vld [vmem:[%s130] sm:$0xf]
        %v146 = vld [vmem:[%s130 + $0x4] sm:$0xf]
        %v147 = vld [vmem:[%s130 + $0x8] sm:$0xf]
        %v148 = vld [vmem:[%s130 + $0xc] sm:$0xf]
        %v149 = vld [vmem:[%s130 + $0x10] sm:$0xf]
        %v150 = vld [vmem:[%s130 + $0x14] sm:$0xf]
        %v151 = vld [vmem:[%s130 + $0x18] sm:$0xf]
        %v152 = vld [vmem:[%s130 + $0x1c] sm:$0xf]
        %v153 = vld [vmem:[%s130 + $0x20] sm:$0xf]
        %v154 = vld [vmem:[%s130 + $0x24] sm:$0xf]
        %v155 = vld [vmem:[%s130 + $0x28] sm:$0xf]
        %v156 = vld [vmem:[%s130 + $0x2c] sm:$0xf]
        %v157 = vld [vmem:[%s130 + $0x30] sm:$0xf]
        %v158 = vld [vmem:[%s130 + $0x34] sm:$0xf]
        %v159 = vld [vmem:[%s130 + $0x38] sm:$0xf]
        %v160 = vld [vmem:[%s130 + $0x3c] sm:$0xf]
        %v161 = vld [vmem:[%s130 + $0x40] sm:$0xf]
        %v162 = vld [vmem:[%s130 + $0x44] sm:$0xf]
        %v163 = vld [vmem:[%s130 + $0x48] sm:$0xf]
        %v164 = vld [vmem:[%s130 + $0x4c] sm:$0xf]
        %v165 = vld [vmem:[%s130 + $0x50] sm:$0xf]
        %v166 = vld [vmem:[%s130 + $0x54] sm:$0xf]
        %v167 = vld [vmem:[%s130 + $0x58] sm:$0xf]
        %v168 = vld [vmem:[%s130 + $0x5c] sm:$0xf]
        %v169 = vld [vmem:[%s130 + $0x60] sm:$0xf]
        %v170 = vld [vmem:[%s130 + $0x64] sm:$0xf]
        %v171 = vld [vmem:[%s130 + $0x68] sm:$0xf]
        %v172 = vld [vmem:[%s130 + $0x6c] sm:$0xf]
        %v173 = vld [vmem:[%s130 + $0x70] sm:$0xf]
        %v174 = vld [vmem:[%s130 + $0x74] sm:$0xf]
        %v175 = vld [vmem:[%s130 + $0x78] sm:$0xf]
        %v176 = vld [vmem:[%s130 + $0x7c] sm:$0xf]
        %v177 = vld [vmem:[%s1] sm:$0xf]
        %v178 = vld [vmem:[%s1 + $0x4] sm:$0xf]
        %v179 = vld [vmem:[%s1 + $0x8] sm:$0xf]
        %v180 = vld [vmem:[%s1 + $0xc] sm:$0xf]
        %v181 = vld [vmem:[%s1 + $0x10] sm:$0xf]
        %v182 = vld [vmem:[%s1 + $0x14] sm:$0xf]
        %v183 = vld [vmem:[%s1 + $0x18] sm:$0xf]
        %v184 = vld [vmem:[%s1 + $0x1c] sm:$0xf]
        %v185 = vld [vmem:[%s1 + $0x20] sm:$0xf]
        %v186 = vld [vmem:[%s1 + $0x24] sm:$0xf]
        %v187 = vld [vmem:[%s1 + $0x28] sm:$0xf]
        %v188 = vld [vmem:[%s1 + $0x2c] sm:$0xf]
        %v189 = vld [vmem:[%s1 + $0x30] sm:$0xf]
        %v190 = vld [vmem:[%s1 + $0x34] sm:$0xf]
        %v191 = vld [vmem:[%s1 + $0x38] sm:$0xf]
        %v192 = vld [vmem:[%s1 + $0x3c] sm:$0xf]
        %v193 = vld [vmem:[%s1 + $0x40] sm:$0xf]
        %v194 = vld [vmem:[%s1 + $0x44] sm:$0xf]
        %v195 = vld [vmem:[%s1 + $0x48] sm:$0xf]
        %v196 = vld [vmem:[%s1 + $0x4c] sm:$0xf]
        %v197 = vld [vmem:[%s1 + $0x50] sm:$0xf]
        %v198 = vld [vmem:[%s1 + $0x54] sm:$0xf]
        %v199 = vld [vmem:[%s1 + $0x58] sm:$0xf]
        %v200 = vld [vmem:[%s1 + $0x5c] sm:$0xf]
        %v201 = vld [vmem:[%s1 + $0x60] sm:$0xf]
        %v202 = vld [vmem:[%s1 + $0x64] sm:$0xf]
        %v203 = vld [vmem:[%s1 + $0x68] sm:$0xf]
        %v204 = vld [vmem:[%s1 + $0x6c] sm:$0xf]
        %v205 = vld [vmem:[%s1 + $0x70] sm:$0xf]
        %v206 = vld [vmem:[%s1 + $0x74] sm:$0xf]
        %v207 = vld [vmem:[%s1 + $0x78] sm:$0xf]
        %v208 = vld [vmem:[%s1 + $0x7c] sm:$0xf]
        %v209 = vld [vmem:[%s1 + $0x80] sm:$0xf]
        %v210 = vld [vmem:[%s1 + $0x84] sm:$0xf]
        %v211 = vld [vmem:[%s1 + $0x88] sm:$0xf]
        %v212 = vld [vmem:[%s1 + $0x8c] sm:$0xf]
        %v213 = vld [vmem:[%s1 + $0x90] sm:$0xf]
        %v214 = vld [vmem:[%s1 + $0x94] sm:$0xf]
        %v215 = vld [vmem:[%s1 + $0x98] sm:$0xf]
        %v216 = vld [vmem:[%s1 + $0x9c] sm:$0xf]
        %v217 = vld [vmem:[%s1 + $0xa0] sm:$0xf]
        %v218 = vld [vmem:[%s1 + $0xa4] sm:$0xf]
        %v219 = vld [vmem:[%s1 + $0xa8] sm:$0xf]
        %v220 = vld [vmem:[%s1 + $0xac] sm:$0xf]
        %v221 = vld [vmem:[%s1 + $0xb0] sm:$0xf]
        %v222 = vld [vmem:[%s1 + $0xb4] sm:$0xf]
        %v223 = vld [vmem:[%s1 + $0xb8] sm:$0xf]
        %v224 = vld [vmem:[%s1 + $0xbc] sm:$0xf]
        %v225 = vld [vmem:[%s1 + $0xc0] sm:$0xf]
        %v226 = vld [vmem:[%s1 + $0xc4] sm:$0xf]
        %v227 = vld [vmem:[%s1 + $0xc8] sm:$0xf]
        %v228 = vld [vmem:[%s1 + $0xcc] sm:$0xf]
        %v229 = vld [vmem:[%s1 + $0xd0] sm:$0xf]
        %v230 = vld [vmem:[%s1 + $0xd4] sm:$0xf]
        %v231 = vld [vmem:[%s1 + $0xd8] sm:$0xf]
        %v232 = vld [vmem:[%s1 + $0xdc] sm:$0xf]
        %v233 = vld [vmem:[%s1 + $0xe0] sm:$0xf]
        %v234 = vld [vmem:[%s1 + $0xe4] sm:$0xf]
        %v235 = vld [vmem:[%s1 + $0xe8] sm:$0xf]
        %v236 = vld [vmem:[%s1 + $0xec] sm:$0xf]
        %v237 = vld [vmem:[%s1 + $0xf0] sm:$0xf]
        %v238 = vld [vmem:[%s1 + $0xf4] sm:$0xf]
        %v239 = vld [vmem:[%s1 + $0xf8] sm:$0xf]
        %v240 = vld [vmem:[%s1 + $0xfc] sm:$0xf]
        %v273 = vunpack.c.l.b16 %v145
        %v274 = vunpack.c.l.b16 %v146
        %v275 = vunpack.c.l.b16 %v147
        %v276 = vunpack.c.l.b16 %v148
        %v277 = vunpack.c.l.b16 %v149
        %v278 = vunpack.c.l.b16 %v150
        %v279 = vunpack.c.l.b16 %v151
        %v280 = vunpack.c.l.b16 %v152
        %v281 = vunpack.c.l.b16 %v153
        %v282 = vunpack.c.l.b16 %v154
        %v283 = vunpack.c.l.b16 %v155
        %v284 = vunpack.c.l.b16 %v156
        %v285 = vunpack.c.l.b16 %v157
        %v286 = vunpack.c.l.b16 %v158
        %v287 = vunpack.c.l.b16 %v159
        %v288 = vunpack.c.l.b16 %v160
        %v289 = vunpack.c.l.b16 %v161
        %v290 = vunpack.c.l.b16 %v162
        %v291 = vunpack.c.l.b16 %v163
        %v292 = vunpack.c.l.b16 %v164
        %v293 = vunpack.c.l.b16 %v165
        %v294 = vunpack.c.l.b16 %v166
        %v295 = vunpack.c.l.b16 %v167
        %v296 = vunpack.c.l.b16 %v168
        %v297 = vunpack.c.l.b16 %v169
        %v298 = vunpack.c.l.b16 %v170
        %v299 = vunpack.c.l.b16 %v171
        %v300 = vunpack.c.l.b16 %v172
        %v301 = vunpack.c.l.b16 %v173
        %v302 = vunpack.c.l.b16 %v174
        %v303 = vunpack.c.l.b16 %v175
        %v304 = vunpack.c.l.b16 %v176
        %v305 = vpack.c.b16 %v274, %v273
        %v306 = vpack.c.b16 %v276, %v275
        %v307 = vpack.c.b16 %v278, %v277
        %v308 = vpack.c.b16 %v280, %v279
        %v309 = vpack.c.b16 %v282, %v281
        %v310 = vpack.c.b16 %v284, %v283
        %v311 = vpack.c.b16 %v286, %v285
        %v312 = vpack.c.b16 %v288, %v287
        %v313 = vpack.c.b16 %v290, %v289
        %v314 = vpack.c.b16 %v292, %v291
        %v315 = vpack.c.b16 %v294, %v293
        %v316 = vpack.c.b16 %v296, %v295
        %v317 = vpack.c.b16 %v298, %v297
        %v318 = vpack.c.b16 %v300, %v299
        %v319 = vpack.c.b16 %v302, %v301
        %v320 = vpack.c.b16 %v304, %v303
        %v385 = vunpack.c.l.b16 %v177
        %v386 = vunpack.c.l.b16 %v178
        %v387 = vunpack.c.l.b16 %v179
        %v388 = vunpack.c.l.b16 %v180
        %v389 = vunpack.c.l.b16 %v181
        %v390 = vunpack.c.l.b16 %v182
        %v391 = vunpack.c.l.b16 %v183
        %v392 = vunpack.c.l.b16 %v184
        %v393 = vunpack.c.l.b16 %v185
        %v394 = vunpack.c.l.b16 %v186
        %v395 = vunpack.c.l.b16 %v187
        %v396 = vunpack.c.l.b16 %v188
        %v397 = vunpack.c.l.b16 %v189
        %v398 = vunpack.c.l.b16 %v190
        %v399 = vunpack.c.l.b16 %v191
        %v400 = vunpack.c.l.b16 %v192
        %v401 = vunpack.c.l.b16 %v193
        %v402 = vunpack.c.l.b16 %v194
        %v403 = vunpack.c.l.b16 %v195
        %v404 = vunpack.c.l.b16 %v196
        %v405 = vunpack.c.l.b16 %v197
        %v406 = vunpack.c.l.b16 %v198
        %v407 = vunpack.c.l.b16 %v199
        %v408 = vunpack.c.l.b16 %v200
        %v409 = vunpack.c.l.b16 %v201
        %v410 = vunpack.c.l.b16 %v202
        %v411 = vunpack.c.l.b16 %v203
        %v412 = vunpack.c.l.b16 %v204
        %v413 = vunpack.c.l.b16 %v205
        %v414 = vunpack.c.l.b16 %v206
        %v415 = vunpack.c.l.b16 %v207
        %v416 = vunpack.c.l.b16 %v208
        %v417 = vunpack.c.l.b16 %v209
        %v418 = vunpack.c.l.b16 %v210
        %v419 = vunpack.c.l.b16 %v211
        %v420 = vunpack.c.l.b16 %v212
        %v421 = vunpack.c.l.b16 %v213
        %v422 = vunpack.c.l.b16 %v214
        %v423 = vunpack.c.l.b16 %v215
        %v424 = vunpack.c.l.b16 %v216
        %v425 = vunpack.c.l.b16 %v217
        %v426 = vunpack.c.l.b16 %v218
        %v427 = vunpack.c.l.b16 %v219
        %v428 = vunpack.c.l.b16 %v220
        %v429 = vunpack.c.l.b16 %v221
        %v430 = vunpack.c.l.b16 %v222
        %v431 = vunpack.c.l.b16 %v223
        %v432 = vunpack.c.l.b16 %v224
        %v433 = vunpack.c.l.b16 %v225
        %v434 = vunpack.c.l.b16 %v226
        %v435 = vunpack.c.l.b16 %v227
        %v436 = vunpack.c.l.b16 %v228
        %v437 = vunpack.c.l.b16 %v229
        %v438 = vunpack.c.l.b16 %v230
        %v439 = vunpack.c.l.b16 %v231
        %v440 = vunpack.c.l.b16 %v232
        %v441 = vunpack.c.l.b16 %v233
        %v442 = vunpack.c.l.b16 %v234
        %v443 = vunpack.c.l.b16 %v235
        %v444 = vunpack.c.l.b16 %v236
        %v445 = vunpack.c.l.b16 %v237
        %v446 = vunpack.c.l.b16 %v238
        %v447 = vunpack.c.l.b16 %v239
        %v448 = vunpack.c.l.b16 %v240
        %v449 = vpack.c.b16 %v386, %v385
        %v450 = vpack.c.b16 %v388, %v387
        %v451 = vpack.c.b16 %v390, %v389
        %v452 = vpack.c.b16 %v392, %v391
        %v453 = vpack.c.b16 %v394, %v393
        %v454 = vpack.c.b16 %v396, %v395
        %v455 = vpack.c.b16 %v398, %v397
        %v456 = vpack.c.b16 %v400, %v399
        %v457 = vpack.c.b16 %v402, %v401
        %v458 = vpack.c.b16 %v404, %v403
        %v459 = vpack.c.b16 %v406, %v405
        %v460 = vpack.c.b16 %v408, %v407
        %v461 = vpack.c.b16 %v410, %v409
        %v462 = vpack.c.b16 %v412, %v411
        %v463 = vpack.c.b16 %v414, %v413
        %v464 = vpack.c.b16 %v416, %v415
        %v465 = vpack.c.b16 %v418, %v417
        %v466 = vpack.c.b16 %v420, %v419
        %v467 = vpack.c.b16 %v422, %v421
        %v468 = vpack.c.b16 %v424, %v423
        %v469 = vpack.c.b16 %v426, %v425
        %v470 = vpack.c.b16 %v428, %v427
        %v471 = vpack.c.b16 %v430, %v429
        %v472 = vpack.c.b16 %v432, %v431
        %v473 = vpack.c.b16 %v434, %v433
        %v474 = vpack.c.b16 %v436, %v435
        %v475 = vpack.c.b16 %v438, %v437
        %v476 = vpack.c.b16 %v440, %v439
        %v477 = vpack.c.b16 %v442, %v441
        %v478 = vpack.c.b16 %v444, %v443
        %v479 = vpack.c.b16 %v446, %v445
        %v480 = vpack.c.b16 %v448, %v447
        %vm481 = vcmask 523264
        %v483 = vsel %vm481, %v305, 0
        %v486 = vsel %vm481, %v306, 0
        %v489 = vsel %vm481, %v307, 0
        %v492 = vsel %vm481, %v308, 0
        %v495 = vsel %vm481, %v309, 0
        %v498 = vsel %vm481, %v310, 0
        %v501 = vsel %vm481, %v311, 0
        %v504 = vsel %vm481, %v312, 0
        %v507 = vsel %vm481, %v313, 0
        %v510 = vsel %vm481, %v314, 0
        %v513 = vsel %vm481, %v315, 0
        %v516 = vsel %vm481, %v316, 0
        %v519 = vsel %vm481, %v317, 0
        %v522 = vsel %vm481, %v318, 0
        %v525 = vsel %vm481, %v319, 0
        %v528 = vsel %vm481, %v320, 0
        %v531 = vsel %vm481, %v449, 0
        %v534 = vsel %vm481, %v450, 0
        %v537 = vsel %vm481, %v451, 0
        %v540 = vsel %vm481, %v452, 0
        %v543 = vsel %vm481, %v453, 0
        %v546 = vsel %vm481, %v454, 0
        %v549 = vsel %vm481, %v455, 0
        %v552 = vsel %vm481, %v456, 0
        %v555 = vsel %vm481, %v457, 0
        %v558 = vsel %vm481, %v458, 0
        %v561 = vsel %vm481, %v459, 0
        %v564 = vsel %vm481, %v460, 0
        %v567 = vsel %vm481, %v461, 0
        %v570 = vsel %vm481, %v462, 0
        %v573 = vsel %vm481, %v463, 0
        %v576 = vsel %vm481, %v464, 0
        %v579 = vsel %vm481, %v465, 0
        %v582 = vsel %vm481, %v466, 0
        %v585 = vsel %vm481, %v467, 0
        %v588 = vsel %vm481, %v468, 0
        %v591 = vsel %vm481, %v469, 0
        %v594 = vsel %vm481, %v470, 0
        %v597 = vsel %vm481, %v471, 0
        %v600 = vsel %vm481, %v472, 0
        %v603 = vsel %vm481, %v473, 0
        %v606 = vsel %vm481, %v474, 0
        %v609 = vsel %vm481, %v475, 0
        %v612 = vsel %vm481, %v476, 0
        %v615 = vsel %vm481, %v477, 0
        %v618 = vsel %vm481, %v478, 0
        %v621 = vsel %vm481, %v479, 0
        %v624 = vsel %vm481, %v480, 0
        %626 = vmatprep.subr.bf16.mxu0 0
        %627 = vmatpush1.bf16.xpose.msra.mxu0 %v531
        %628 = vmatprep.subr.bf16.mxu0 0
        %629 = vmatpush1.bf16.xpose.msra.mxu0 %v534
        %630 = vmatprep.subr.bf16.mxu0 0
        %631 = vmatpush1.bf16.xpose.msra.mxu0 %v537
        %632 = vmatprep.subr.bf16.mxu0 0
        %633 = vmatpush1.bf16.xpose.msra.mxu0 %v540
        %634 = vmatprep.subr.bf16.mxu0 0
        %635 = vmatpush1.bf16.xpose.msra.mxu0 %v543
        %636 = vmatprep.subr.bf16.mxu0 0
        %637 = vmatpush1.bf16.xpose.msra.mxu0 %v546
        %638 = vmatprep.subr.bf16.mxu0 0
        %639 = vmatpush1.bf16.xpose.msra.mxu0 %v549
        %640 = vmatprep.subr.bf16.mxu0 0
        %641 = vmatpush1.bf16.xpose.msra.mxu0 %v552
        %642 = vmatprep.subr.bf16.mxu0 0
        %643 = vmatpush1.bf16.xpose.msra.mxu0 %v555
        %644 = vmatprep.subr.bf16.mxu0 0
        %645 = vmatpush1.bf16.xpose.msra.mxu0 %v558
        %646 = vmatprep.subr.bf16.mxu0 0
        %647 = vmatpush1.bf16.xpose.msra.mxu0 %v561
        %648 = vmatprep.subr.bf16.mxu0 0
        %649 = vmatpush1.bf16.xpose.msra.mxu0 %v564
        %650 = vmatprep.subr.bf16.mxu0 0
        %651 = vmatpush1.bf16.xpose.msra.mxu0 %v567
        %652 = vmatprep.subr.bf16.mxu0 0
        %653 = vmatpush1.bf16.xpose.msra.mxu0 %v570
        %654 = vmatprep.subr.bf16.mxu0 0
        %655 = vmatpush1.bf16.xpose.msra.mxu0 %v573
        %656 = vmatprep.subr.bf16.mxu0 0
        %657 = vmatpush1.bf16.xpose.msra.mxu0 %v576
        %658 = vmatprep.mubr.bf16.mxu0 0
        %659 = vmatmul.mubr.bf16.gmra.mrb[0].mxu0 %v483
        %v660 = vpop.f32.mrb[0].mxu0
        %v661 = vadd.f32 0.0, %v660
        %v662 = vpop.f32.mrb[0].mxu0
        %v663 = vadd.f32 0.0, %v662
        %v664 = vpop.f32.mrb[0].mxu0
        %v665 = vadd.f32 0.0, %v664
        %v666 = vpop.f32.mrb[0].mxu0
        %v667 = vadd.f32 0.0, %v666
        %668 = vmatprep.mubr.bf16.mxu0 0
        %669 = vmatmul.mubr.bf16.gmra.mrb[0].mxu0 %v486
        %v670 = vpop.f32.mrb[0].mxu0
        %v671 = vadd.f32 0.0, %v670
        %v672 = vpop.f32.mrb[0].mxu0
        %v673 = vadd.f32 0.0, %v672
        %v674 = vpop.f32.mrb[0].mxu0
        %v675 = vadd.f32 0.0, %v674
        %v676 = vpop.f32.mrb[0].mxu0
        %v677 = vadd.f32 0.0, %v676
        %678 = vmatprep.mubr.bf16.mxu0 0
        %679 = vmatmul.mubr.bf16.gmra.mrb[0].mxu0 %v489
        %v680 = vpop.f32.mrb[0].mxu0
        %v681 = vadd.f32 0.0, %v680
        %v682 = vpop.f32.mrb[0].mxu0
        %v683 = vadd.f32 0.0, %v682
        %v684 = vpop.f32.mrb[0].mxu0
        %v685 = vadd.f32 0.0, %v684
        %v686 = vpop.f32.mrb[0].mxu0
        %v687 = vadd.f32 0.0, %v686
        %688 = vmatprep.mubr.bf16.mxu0 0
        %689 = vmatmul.mubr.bf16.gmra.mrb[0].mxu0 %v492
        %v690 = vpop.f32.mrb[0].mxu0
        %v691 = vadd.f32 0.0, %v690
        %v692 = vpop.f32.mrb[0].mxu0
        %v693 = vadd.f32 0.0, %v692
        %v694 = vpop.f32.mrb[0].mxu0
        %v695 = vadd.f32 0.0, %v694
        %v696 = vpop.f32.mrb[0].mxu0
        %v697 = vadd.f32 0.0, %v696
        %698 = vmatprep.mubr.bf16.mxu0 0
        %699 = vmatmul.mubr.bf16.gmra.mrb[0].mxu0 %v495
        %v700 = vpop.f32.mrb[0].mxu0
        %v701 = vadd.f32 0.0, %v700
        %v702 = vpop.f32.mrb[0].mxu0
        %v703 = vadd.f32 0.0, %v702
        %v704 = vpop.f32.mrb[0].mxu0
        %v705 = vadd.f32 0.0, %v704
        %v706 = vpop.f32.mrb[0].mxu0
        %v707 = vadd.f32 0.0, %v706
        %708 = vmatprep.mubr.bf16.mxu0 0
        %709 = vmatmul.mubr.bf16.gmra.mrb[0].mxu0 %v498
        %v710 = vpop.f32.mrb[0].mxu0
        %v711 = vadd.f32 0.0, %v710
        %v712 = vpop.f32.mrb[0].mxu0
        %v713 = vadd.f32 0.0, %v712
        %v714 = vpop.f32.mrb[0].mxu0
        %v715 = vadd.f32 0.0, %v714
        %v716 = vpop.f32.mrb[0].mxu0
        %v717 = vadd.f32 0.0, %v716
        %718 = vmatprep.mubr.bf16.mxu0 0
        %719 = vmatmul.mubr.bf16.gmra.mrb[0].mxu0 %v501
        %v720 = vpop.f32.mrb[0].mxu0
        %v721 = vadd.f32 0.0, %v720
        %v722 = vpop.f32.mrb[0].mxu0
        %v723 = vadd.f32 0.0, %v722
        %v724 = vpop.f32.mrb[0].mxu0
        %v725 = vadd.f32 0.0, %v724
        %v726 = vpop.f32.mrb[0].mxu0
        %v727 = vadd.f32 0.0, %v726
        %728 = vmatprep.mubr.bf16.mxu0 0
        %729 = vmatmul.mubr.bf16.gmra.mrb[0].mxu0 %v504
        %v730 = vpop.f32.mrb[0].mxu0
        %v731 = vadd.f32 0.0, %v730
        %v732 = vpop.f32.mrb[0].mxu0
        %v733 = vadd.f32 0.0, %v732
        %v734 = vpop.f32.mrb[0].mxu0
        %v735 = vadd.f32 0.0, %v734
        %v736 = vpop.f32.mrb[0].mxu0
        %v737 = vadd.f32 0.0, %v736
        %738 = vmatprep.mubr.bf16.mxu0 0
        %739 = vmatmul.mubr.bf16.gmra.mrb[0].mxu0 %v507
        %v740 = vpop.f32.mrb[0].mxu0
        %v741 = vadd.f32 0.0, %v740
        %v742 = vpop.f32.mrb[0].mxu0
        %v743 = vadd.f32 0.0, %v742
        %v744 = vpop.f32.mrb[0].mxu0
        %v745 = vadd.f32 0.0, %v744
        %v746 = vpop.f32.mrb[0].mxu0
        %v747 = vadd.f32 0.0, %v746
        %748 = vmatprep.mubr.bf16.mxu0 0
        %749 = vmatmul.mubr.bf16.gmra.mrb[0].mxu0 %v510
        %v750 = vpop.f32.mrb[0].mxu0
        %v751 = vadd.f32 0.0, %v750
        %v752 = vpop.f32.mrb[0].mxu0
        %v753 = vadd.f32 0.0, %v752
        %v754 = vpop.f32.mrb[0].mxu0
        %v755 = vadd.f32 0.0, %v754
        %v756 = vpop.f32.mrb[0].mxu0
        %v757 = vadd.f32 0.0, %v756
        %758 = vmatprep.mubr.bf16.mxu0 0
        %759 = vmatmul.mubr.bf16.gmra.mrb[0].mxu0 %v513
        %v760 = vpop.f32.mrb[0].mxu0
        %v761 = vadd.f32 0.0, %v760
        %v762 = vpop.f32.mrb[0].mxu0
        %v763 = vadd.f32 0.0, %v762
        %v764 = vpop.f32.mrb[0].mxu0
        %v765 = vadd.f32 0.0, %v764
        %v766 = vpop.f32.mrb[0].mxu0
        %v767 = vadd.f32 0.0, %v766
        %768 = vmatprep.mubr.bf16.mxu0 0
        %769 = vmatmul.mubr.bf16.gmra.mrb[0].mxu0 %v516
        %v770 = vpop.f32.mrb[0].mxu0
        %v771 = vadd.f32 0.0, %v770
        %v772 = vpop.f32.mrb[0].mxu0
        %v773 = vadd.f32 0.0, %v772
        %v774 = vpop.f32.mrb[0].mxu0
        %v775 = vadd.f32 0.0, %v774
        %v776 = vpop.f32.mrb[0].mxu0
        %v777 = vadd.f32 0.0, %v776
        %778 = vmatprep.mubr.bf16.mxu0 0
        %779 = vmatmul.mubr.bf16.gmra.mrb[0].mxu0 %v519
        %v780 = vpop.f32.mrb[0].mxu0
        %v781 = vadd.f32 0.0, %v780
        %v782 = vpop.f32.mrb[0].mxu0
        %v783 = vadd.f32 0.0, %v782
        %v784 = vpop.f32.mrb[0].mxu0
        %v785 = vadd.f32 0.0, %v784
        %v786 = vpop.f32.mrb[0].mxu0
        %v787 = vadd.f32 0.0, %v786
        %788 = vmatprep.mubr.bf16.mxu0 0
        %789 = vmatmul.mubr.bf16.gmra.mrb[0].mxu0 %v522
        %v790 = vpop.f32.mrb[0].mxu0
        %v791 = vadd.f32 0.0, %v790
        %v792 = vpop.f32.mrb[0].mxu0
        %v793 = vadd.f32 0.0, %v792
        %v794 = vpop.f32.mrb[0].mxu0
        %v795 = vadd.f32 0.0, %v794
        %v796 = vpop.f32.mrb[0].mxu0
        %v797 = vadd.f32 0.0, %v796
        %798 = vmatprep.mubr.bf16.mxu0 0
        %799 = vmatmul.mubr.bf16.gmra.mrb[0].mxu0 %v525
        %v800 = vpop.f32.mrb[0].mxu0
        %v801 = vadd.f32 0.0, %v800
        %v802 = vpop.f32.mrb[0].mxu0
        %v803 = vadd.f32 0.0, %v802
        %v804 = vpop.f32.mrb[0].mxu0
        %v805 = vadd.f32 0.0, %v804
        %v806 = vpop.f32.mrb[0].mxu0
        %v807 = vadd.f32 0.0, %v806
        %808 = vmatprep.mubr.bf16.mxu0 0
        %809 = vmatmul.mubr.bf16.gmra.mrb[0].mxu0 %v528
        %v810 = vpop.f32.mrb[0].mxu0
        %v811 = vadd.f32 0.0, %v810
        %v812 = vpop.f32.mrb[0].mxu0
        %v813 = vadd.f32 0.0, %v812
        %v814 = vpop.f32.mrb[0].mxu0
        %v815 = vadd.f32 0.0, %v814
        %v816 = vpop.f32.mrb[0].mxu0
        %v817 = vadd.f32 0.0, %v816
        %818 = vdwg.mxu0
        %819 = vmatprep.subr.bf16.mxu0 0
        %820 = vmatpush1.bf16.xpose.msra.mxu0 %v579
        %821 = vmatprep.subr.bf16.mxu0 0
        %822 = vmatpush1.bf16.xpose.msra.mxu0 %v582
        %823 = vmatprep.subr.bf16.mxu0 0
        %824 = vmatpush1.bf16.xpose.msra.mxu0 %v585
        %825 = vmatprep.subr.bf16.mxu0 0
        %826 = vmatpush1.bf16.xpose.msra.mxu0 %v588
        %827 = vmatprep.subr.bf16.mxu0 0
        %828 = vmatpush1.bf16.xpose.msra.mxu0 %v591
        %829 = vmatprep.subr.bf16.mxu0 0
        %830 = vmatpush1.bf16.xpose.msra.mxu0 %v594
        %831 = vmatprep.subr.bf16.mxu0 0
        %832 = vmatpush1.bf16.xpose.msra.mxu0 %v597
        %833 = vmatprep.subr.bf16.mxu0 0
        %834 = vmatpush1.bf16.xpose.msra.mxu0 %v600
        %835 = vmatprep.subr.bf16.mxu0 0
        %836 = vmatpush1.bf16.xpose.msra.mxu0 %v603
        %837 = vmatprep.subr.bf16.mxu0 0
        %838 = vmatpush1.bf16.xpose.msra.mxu0 %v606
        %839 = vmatprep.subr.bf16.mxu0 0
        %840 = vmatpush1.bf16.xpose.msra.mxu0 %v609
        %841 = vmatprep.subr.bf16.mxu0 0
        %842 = vmatpush1.bf16.xpose.msra.mxu0 %v612
        %843 = vmatprep.subr.bf16.mxu0 0
        %844 = vmatpush1.bf16.xpose.msra.mxu0 %v615
        %845 = vmatprep.subr.bf16.mxu0 0
        %846 = vmatpush1.bf16.xpose.msra.mxu0 %v618
        %847 = vmatprep.subr.bf16.mxu0 0
        %848 = vmatpush1.bf16.xpose.msra.mxu0 %v621
        %849 = vmatprep.subr.bf16.mxu0 0
        %850 = vmatpush1.bf16.xpose.msra.mxu0 %v624
        %851 = vmatprep.mubr.bf16.mxu0 0
        %852 = vmatmul.mubr.bf16.gmra.mrb[0].mxu0 %v483
        %v853 = vpop.f32.mrb[0].mxu0
        %v854 = vadd.f32 0.0, %v853
        %v855 = vpop.f32.mrb[0].mxu0
        %v856 = vadd.f32 0.0, %v855
        %v857 = vpop.f32.mrb[0].mxu0
        %v858 = vadd.f32 0.0, %v857
        %v859 = vpop.f32.mrb[0].mxu0
        %v860 = vadd.f32 0.0, %v859
        %861 = vmatprep.mubr.bf16.mxu0 0
        %862 = vmatmul.mubr.bf16.gmra.mrb[0].mxu0 %v486
        %v863 = vpop.f32.mrb[0].mxu0
        %v864 = vadd.f32 0.0, %v863
        %v865 = vpop.f32.mrb[0].mxu0
        %v866 = vadd.f32 0.0, %v865
        %v867 = vpop.f32.mrb[0].mxu0
        %v868 = vadd.f32 0.0, %v867
        %v869 = vpop.f32.mrb[0].mxu0
        %v870 = vadd.f32 0.0, %v869
        %871 = vmatprep.mubr.bf16.mxu0 0
        %872 = vmatmul.mubr.bf16.gmra.mrb[0].mxu0 %v489
        %v873 = vpop.f32.mrb[0].mxu0
        %v874 = vadd.f32 0.0, %v873
        %v875 = vpop.f32.mrb[0].mxu0
        %v876 = vadd.f32 0.0, %v875
        %v877 = vpop.f32.mrb[0].mxu0
        %v878 = vadd.f32 0.0, %v877
        %v879 = vpop.f32.mrb[0].mxu0
        %v880 = vadd.f32 0.0, %v879
        %881 = vmatprep.mubr.bf16.mxu0 0
        %882 = vmatmul.mubr.bf16.gmra.mrb[0].mxu0 %v492
        %v883 = vpop.f32.mrb[0].mxu0
        %v884 = vadd.f32 0.0, %v883
        %v885 = vpop.f32.mrb[0].mxu0
        %v886 = vadd.f32 0.0, %v885
        %v887 = vpop.f32.mrb[0].mxu0
        %v888 = vadd.f32 0.0, %v887
        %v889 = vpop.f32.mrb[0].mxu0
        %v890 = vadd.f32 0.0, %v889
        %891 = vmatprep.mubr.bf16.mxu0 0
        %892 = vmatmul.mubr.bf16.gmra.mrb[0].mxu0 %v495
        %v893 = vpop.f32.mrb[0].mxu0
        %v894 = vadd.f32 0.0, %v893
        %v895 = vpop.f32.mrb[0].mxu0
        %v896 = vadd.f32 0.0, %v895
        %v897 = vpop.f32.mrb[0].mxu0
        %v898 = vadd.f32 0.0, %v897
        %v899 = vpop.f32.mrb[0].mxu0
        %v900 = vadd.f32 0.0, %v899
        %901 = vmatprep.mubr.bf16.mxu0 0
        %902 = vmatmul.mubr.bf16.gmra.mrb[0].mxu0 %v498
        %v903 = vpop.f32.mrb[0].mxu0
        %v904 = vadd.f32 0.0, %v903
        %v905 = vpop.f32.mrb[0].mxu0
        %v906 = vadd.f32 0.0, %v905
        %v907 = vpop.f32.mrb[0].mxu0
        %v908 = vadd.f32 0.0, %v907
        %v909 = vpop.f32.mrb[0].mxu0
        %v910 = vadd.f32 0.0, %v909
        %911 = vmatprep.mubr.bf16.mxu0 0
        %912 = vmatmul.mubr.bf16.gmra.mrb[0].mxu0 %v501
        %v913 = vpop.f32.mrb[0].mxu0
        %v914 = vadd.f32 0.0, %v913
        %v915 = vpop.f32.mrb[0].mxu0
        %v916 = vadd.f32 0.0, %v915
        %v917 = vpop.f32.mrb[0].mxu0
        %v918 = vadd.f32 0.0, %v917
        %v919 = vpop.f32.mrb[0].mxu0
        %v920 = vadd.f32 0.0, %v919
        %921 = vmatprep.mubr.bf16.mxu0 0
        %922 = vmatmul.mubr.bf16.gmra.mrb[0].mxu0 %v504
        %v923 = vpop.f32.mrb[0].mxu0
        %v924 = vadd.f32 0.0, %v923
        %v925 = vpop.f32.mrb[0].mxu0
        %v926 = vadd.f32 0.0, %v925
        %v927 = vpop.f32.mrb[0].mxu0
        %v928 = vadd.f32 0.0, %v927
        %v929 = vpop.f32.mrb[0].mxu0
        %v930 = vadd.f32 0.0, %v929
        %931 = vmatprep.mubr.bf16.mxu0 0
        %932 = vmatmul.mubr.bf16.gmra.mrb[0].mxu0 %v507
        %v933 = vpop.f32.mrb[0].mxu0
        %v934 = vadd.f32 0.0, %v933
        %v935 = vpop.f32.mrb[0].mxu0
        %v936 = vadd.f32 0.0, %v935
        %v937 = vpop.f32.mrb[0].mxu0
        %v938 = vadd.f32 0.0, %v937
        %v939 = vpop.f32.mrb[0].mxu0
        %v940 = vadd.f32 0.0, %v939
        %941 = vmatprep.mubr.bf16.mxu0 0
        %942 = vmatmul.mubr.bf16.gmra.mrb[0].mxu0 %v510
        %v943 = vpop.f32.mrb[0].mxu0
        %v944 = vadd.f32 0.0, %v943
        %v945 = vpop.f32.mrb[0].mxu0
        %v946 = vadd.f32 0.0, %v945
        %v947 = vpop.f32.mrb[0].mxu0
        %v948 = vadd.f32 0.0, %v947
        %v949 = vpop.f32.mrb[0].mxu0
        %v950 = vadd.f32 0.0, %v949
        %951 = vmatprep.mubr.bf16.mxu0 0
        %952 = vmatmul.mubr.bf16.gmra.mrb[0].mxu0 %v513
        %v953 = vpop.f32.mrb[0].mxu0
        %v954 = vadd.f32 0.0, %v953
        %v955 = vpop.f32.mrb[0].mxu0
        %v956 = vadd.f32 0.0, %v955
        %v957 = vpop.f32.mrb[0].mxu0
        %v958 = vadd.f32 0.0, %v957
        %v959 = vpop.f32.mrb[0].mxu0
        %v960 = vadd.f32 0.0, %v959
        %961 = vmatprep.mubr.bf16.mxu0 0
        %962 = vmatmul.mubr.bf16.gmra.mrb[0].mxu0 %v516
        %v963 = vpop.f32.mrb[0].mxu0
        %v964 = vadd.f32 0.0, %v963
        %v965 = vpop.f32.mrb[0].mxu0
        %v966 = vadd.f32 0.0, %v965
        %v967 = vpop.f32.mrb[0].mxu0
        %v968 = vadd.f32 0.0, %v967
        %v969 = vpop.f32.mrb[0].mxu0
        %v970 = vadd.f32 0.0, %v969
        %971 = vmatprep.mubr.bf16.mxu0 0
        %972 = vmatmul.mubr.bf16.gmra.mrb[0].mxu0 %v519
        %v973 = vpop.f32.mrb[0].mxu0
        %v974 = vadd.f32 0.0, %v973
        %v975 = vpop.f32.mrb[0].mxu0
        %v976 = vadd.f32 0.0, %v975
        %v977 = vpop.f32.mrb[0].mxu0
        %v978 = vadd.f32 0.0, %v977
        %v979 = vpop.f32.mrb[0].mxu0
        %v980 = vadd.f32 0.0, %v979
        %981 = vmatprep.mubr.bf16.mxu0 0
        %982 = vmatmul.mubr.bf16.gmra.mrb[0].mxu0 %v522
        %v983 = vpop.f32.mrb[0].mxu0
        %v984 = vadd.f32 0.0, %v983
        %v985 = vpop.f32.mrb[0].mxu0
        %v986 = vadd.f32 0.0, %v985
        %v987 = vpop.f32.mrb[0].mxu0
        %v988 = vadd.f32 0.0, %v987
        %v989 = vpop.f32.mrb[0].mxu0
        %v990 = vadd.f32 0.0, %v989
        %991 = vmatprep.mubr.bf16.mxu0 0
        %992 = vmatmul.mubr.bf16.gmra.mrb[0].mxu0 %v525
        %v993 = vpop.f32.mrb[0].mxu0
        %v994 = vadd.f32 0.0, %v993
        %v995 = vpop.f32.mrb[0].mxu0
        %v996 = vadd.f32 0.0, %v995
        %v997 = vpop.f32.mrb[0].mxu0
        %v998 = vadd.f32 0.0, %v997
        %v999 = vpop.f32.mrb[0].mxu0
        %v1000 = vadd.f32 0.0, %v999
        %1001 = vmatprep.mubr.bf16.mxu0 0
        %1002 = vmatmul.mubr.bf16.gmra.mrb[0].mxu0 %v528
        %v1003 = vpop.f32.mrb[0].mxu0
        %v1004 = vadd.f32 0.0, %v1003
        %v1005 = vpop.f32.mrb[0].mxu0
        %v1006 = vadd.f32 0.0, %v1005
        %v1007 = vpop.f32.mrb[0].mxu0
        %v1008 = vadd.f32 0.0, %v1007
        %v1009 = vpop.f32.mrb[0].mxu0
        %v1010 = vadd.f32 0.0, %v1009
        %1011 = vdwg.mxu0
        %v1012 = vmul.f32 %v661, 20.0
        %v1013 = vmul.f32 %v663, 20.0
        %v1014 = vmul.f32 %v854, 20.0
        %v1015 = vmul.f32 %v856, 20.0
        %v1016 = vmul.f32 %v665, 20.0
        %v1017 = vmul.f32 %v667, 20.0
        %v1018 = vmul.f32 %v858, 20.0
        %v1019 = vmul.f32 %v860, 20.0
        %v1020 = vmul.f32 %v671, 20.0
        %v1021 = vmul.f32 %v673, 20.0
        %v1022 = vmul.f32 %v864, 20.0
        %v1023 = vmul.f32 %v866, 20.0
        %v1024 = vmul.f32 %v675, 20.0
        %v1025 = vmul.f32 %v677, 20.0
        %v1026 = vmul.f32 %v868, 20.0
        %v1027 = vmul.f32 %v870, 20.0
        %v1028 = vmul.f32 %v681, 20.0
        %v1029 = vmul.f32 %v683, 20.0
        %v1030 = vmul.f32 %v874, 20.0
        %v1031 = vmul.f32 %v876, 20.0
        %v1032 = vmul.f32 %v685, 20.0
        %v1033 = vmul.f32 %v687, 20.0
        %v1034 = vmul.f32 %v878, 20.0
        %v1035 = vmul.f32 %v880, 20.0
        %v1036 = vmul.f32 %v691, 20.0
        %v1037 = vmul.f32 %v693, 20.0
        %v1038 = vmul.f32 %v884, 20.0
        %v1039 = vmul.f32 %v886, 20.0
        %v1040 = vmul.f32 %v695, 20.0
        %v1041 = vmul.f32 %v697, 20.0
        %v1042 = vmul.f32 %v888, 20.0
        %v1043 = vmul.f32 %v890, 20.0
        %v1044 = vmul.f32 %v701, 20.0
        %v1045 = vmul.f32 %v703, 20.0
        %v1046 = vmul.f32 %v894, 20.0
        %v1047 = vmul.f32 %v896, 20.0
        %v1048 = vmul.f32 %v705, 20.0
        %v1049 = vmul.f32 %v707, 20.0
        %v1050 = vmul.f32 %v898, 20.0
        %v1051 = vmul.f32 %v900, 20.0
        %v1052 = vmul.f32 %v711, 20.0
        %v1053 = vmul.f32 %v713, 20.0
        %v1054 = vmul.f32 %v904, 20.0
        %v1055 = vmul.f32 %v906, 20.0
        %v1056 = vmul.f32 %v715, 20.0
        %v1057 = vmul.f32 %v717, 20.0
        %v1058 = vmul.f32 %v908, 20.0
        %v1059 = vmul.f32 %v910, 20.0
        %v1060 = vmul.f32 %v721, 20.0
        %v1061 = vmul.f32 %v723, 20.0
        %v1062 = vmul.f32 %v914, 20.0
        %v1063 = vmul.f32 %v916, 20.0
        %v1064 = vmul.f32 %v725, 20.0
        %v1065 = vmul.f32 %v727, 20.0
        %v1066 = vmul.f32 %v918, 20.0
        %v1067 = vmul.f32 %v920, 20.0
        %v1068 = vmul.f32 %v731, 20.0
        %v1069 = vmul.f32 %v733, 20.0
        %v1070 = vmul.f32 %v924, 20.0
        %v1071 = vmul.f32 %v926, 20.0
        %v1072 = vmul.f32 %v735, 20.0
        %v1073 = vmul.f32 %v737, 20.0
        %v1074 = vmul.f32 %v928, 20.0
        %v1075 = vmul.f32 %v930, 20.0
        %v1076 = vmul.f32 %v741, 20.0
        %v1077 = vmul.f32 %v743, 20.0
        %v1078 = vmul.f32 %v934, 20.0
        %v1079 = vmul.f32 %v936, 20.0
        %v1080 = vmul.f32 %v745, 20.0
        %v1081 = vmul.f32 %v747, 20.0
        %v1082 = vmul.f32 %v938, 20.0
        %v1083 = vmul.f32 %v940, 20.0
        %v1084 = vmul.f32 %v751, 20.0
        %v1085 = vmul.f32 %v753, 20.0
        %v1086 = vmul.f32 %v944, 20.0
        %v1087 = vmul.f32 %v946, 20.0
        %v1088 = vmul.f32 %v755, 20.0
        %v1089 = vmul.f32 %v757, 20.0
        %v1090 = vmul.f32 %v948, 20.0
        %v1091 = vmul.f32 %v950, 20.0
        %v1092 = vmul.f32 %v761, 20.0
        %v1093 = vmul.f32 %v763, 20.0
        %v1094 = vmul.f32 %v954, 20.0
        %v1095 = vmul.f32 %v956, 20.0
        %v1096 = vmul.f32 %v765, 20.0
        %v1097 = vmul.f32 %v767, 20.0
        %v1098 = vmul.f32 %v958, 20.0
        %v1099 = vmul.f32 %v960, 20.0
        %v1100 = vmul.f32 %v771, 20.0
        %v1101 = vmul.f32 %v773, 20.0
        %v1102 = vmul.f32 %v964, 20.0
        %v1103 = vmul.f32 %v966, 20.0
        %v1104 = vmul.f32 %v775, 20.0
        %v1105 = vmul.f32 %v777, 20.0
        %v1106 = vmul.f32 %v968, 20.0
        %v1107 = vmul.f32 %v970, 20.0
        %v1108 = vmul.f32 %v781, 20.0
        %v1109 = vmul.f32 %v783, 20.0
        %v1110 = vmul.f32 %v974, 20.0
        %v1111 = vmul.f32 %v976, 20.0
        %v1112 = vmul.f32 %v785, 20.0
        %v1113 = vmul.f32 %v787, 20.0
        %v1114 = vmul.f32 %v978, 20.0
        %v1115 = vmul.f32 %v980, 20.0
        %v1116 = vmul.f32 %v791, 20.0
        %v1117 = vmul.f32 %v793, 20.0
        %v1118 = vmul.f32 %v984, 20.0
        %v1119 = vmul.f32 %v986, 20.0
        %v1120 = vmul.f32 %v795, 20.0
        %v1121 = vmul.f32 %v797, 20.0
        %v1122 = vmul.f32 %v988, 20.0
        %v1123 = vmul.f32 %v990, 20.0
        %v1124 = vmul.f32 %v801, 20.0
        %v1125 = vmul.f32 %v803, 20.0
        %v1126 = vmul.f32 %v994, 20.0
        %v1127 = vmul.f32 %v996, 20.0
        %v1128 = vmul.f32 %v805, 20.0
        %v1129 = vmul.f32 %v807, 20.0
        %v1130 = vmul.f32 %v998, 20.0
        %v1131 = vmul.f32 %v1000, 20.0
        %v1132 = vmul.f32 %v811, 20.0
        %v1133 = vmul.f32 %v813, 20.0
        %v1134 = vmul.f32 %v1004, 20.0
        %v1135 = vmul.f32 %v1006, 20.0
        %v1136 = vmul.f32 %v815, 20.0
        %v1137 = vmul.f32 %v817, 20.0
        %v1138 = vmul.f32 %v1008, 20.0
        %v1139 = vmul.f32 %v1010, 20.0
        %s1140 = smul.u32 %s14, 256
        %v1141 = vlaneseq
        %v1142 = vshrl.u32 %v1141, 7
        %v1143 = vadd.s32 %v1142, 8
        %v1144 = vadd.s32 %v1142, 16
        %v1145 = vadd.s32 %v1142, 24
        %v1146 = vadd.s32 %v1142, 32
        %v1147 = vadd.s32 %v1142, 40
        %v1148 = vadd.s32 %v1142, 48
        %v1149 = vadd.s32 %v1142, 56
        %v1150 = vadd.s32 %v1142, 64
        %v1151 = vadd.s32 %v1142, 72
        %v1152 = vadd.s32 %v1142, 80
        %v1153 = vadd.s32 %v1142, 88
        %v1154 = vadd.s32 %v1142, 96
        %v1155 = vadd.s32 %v1142, 104
        %v1156 = vadd.s32 %v1142, 112
        %v1157 = vadd.s32 %v1142, 120
        %v1158 = vadd.s32 %v1142, 128
        %v1159 = vadd.s32 %v1142, 136
        %v1160 = vadd.s32 %v1142, 144
        %v1161 = vadd.s32 %v1142, 152
        %v1162 = vadd.s32 %v1142, 160
        %v1163 = vadd.s32 %v1142, 168
        %v1164 = vadd.s32 %v1142, 176
        %v1165 = vadd.s32 %v1142, 184
        %v1166 = vadd.s32 %v1142, 192
        %v1167 = vadd.s32 %v1142, 200
        %v1168 = vadd.s32 %v1142, 208
        %v1169 = vadd.s32 %v1142, 216
        %v1170 = vadd.s32 %v1142, 224
        %v1171 = vadd.s32 %v1142, 232
        %v1172 = vadd.s32 %v1142, 240
        %v1173 = vadd.s32 %v1142, 248
        %v1174 = vstv %s1140
        %v1175 = vadd.s32 %v1174, %v1142
        %v1176 = vadd.s32 %v1174, %v1143
        %v1177 = vadd.s32 %v1174, %v1144
        %v1178 = vadd.s32 %v1174, %v1145
        %v1179 = vadd.s32 %v1174, %v1146
        %v1180 = vadd.s32 %v1174, %v1147
        %v1181 = vadd.s32 %v1174, %v1148
        %v1182 = vadd.s32 %v1174, %v1149
        %v1183 = vadd.s32 %v1174, %v1150
        %v1184 = vadd.s32 %v1174, %v1151
        %v1185 = vadd.s32 %v1174, %v1152
        %v1186 = vadd.s32 %v1174, %v1153
        %v1187 = vadd.s32 %v1174, %v1154
        %v1188 = vadd.s32 %v1174, %v1155
        %v1189 = vadd.s32 %v1174, %v1156
        %v1190 = vadd.s32 %v1174, %v1157
        %v1191 = vadd.s32 %v1174, %v1158
        %v1192 = vadd.s32 %v1174, %v1159
        %v1193 = vadd.s32 %v1174, %v1160
        %v1194 = vadd.s32 %v1174, %v1161
        %v1195 = vadd.s32 %v1174, %v1162
        %v1196 = vadd.s32 %v1174, %v1163
        %v1197 = vadd.s32 %v1174, %v1164
        %v1198 = vadd.s32 %v1174, %v1165
        %v1199 = vadd.s32 %v1174, %v1166
        %v1200 = vadd.s32 %v1174, %v1167
        %v1201 = vadd.s32 %v1174, %v1168
        %v1202 = vadd.s32 %v1174, %v1169
        %v1203 = vadd.s32 %v1174, %v1170
        %v1204 = vadd.s32 %v1174, %v1171
        %v1205 = vadd.s32 %v1174, %v1172
        %v1206 = vadd.s32 %v1174, %v1173
        %v1207 = vlaneseq
        %v1208 = vand.u32 %v1207, 127
        %v1209 = vadd.s32 %v1208, 128
        %v1210 = vadd.s32 %v1208, 256
        %v1211 = vadd.s32 %v1208, 384
        %v1212 = vsub.f32 %v1012, 20.0
        %v1213 = vsub.f32 %v1013, 20.0
        %v1214 = vsub.f32 %v1014, 20.0
        %v1215 = vsub.f32 %v1015, 20.0
        %v1216 = vsub.f32 %v1016, 20.0
        %v1217 = vsub.f32 %v1017, 20.0
        %v1218 = vsub.f32 %v1018, 20.0
        %v1219 = vsub.f32 %v1019, 20.0
        %v1220 = vsub.f32 %v1020, 20.0
        %v1221 = vsub.f32 %v1021, 20.0
        %v1222 = vsub.f32 %v1022, 20.0
        %v1223 = vsub.f32 %v1023, 20.0
        %v1224 = vsub.f32 %v1024, 20.0
        %v1225 = vsub.f32 %v1025, 20.0
        %v1226 = vsub.f32 %v1026, 20.0
        %v1227 = vsub.f32 %v1027, 20.0
        %v1228 = vsub.f32 %v1028, 20.0
        %v1229 = vsub.f32 %v1029, 20.0
        %v1230 = vsub.f32 %v1030, 20.0
        %v1231 = vsub.f32 %v1031, 20.0
        %v1232 = vsub.f32 %v1032, 20.0
        %v1233 = vsub.f32 %v1033, 20.0
        %v1234 = vsub.f32 %v1034, 20.0
        %v1235 = vsub.f32 %v1035, 20.0
        %v1236 = vsub.f32 %v1036, 20.0
        %v1237 = vsub.f32 %v1037, 20.0
        %v1238 = vsub.f32 %v1038, 20.0
        %v1239 = vsub.f32 %v1039, 20.0
        %v1240 = vsub.f32 %v1040, 20.0
        %v1241 = vsub.f32 %v1041, 20.0
        %v1242 = vsub.f32 %v1042, 20.0
        %v1243 = vsub.f32 %v1043, 20.0
        %v1244 = vsub.f32 %v1044, 20.0
        %v1245 = vsub.f32 %v1045, 20.0
        %v1246 = vsub.f32 %v1046, 20.0
        %v1247 = vsub.f32 %v1047, 20.0
        %v1248 = vsub.f32 %v1048, 20.0
        %v1249 = vsub.f32 %v1049, 20.0
        %v1250 = vsub.f32 %v1050, 20.0
        %v1251 = vsub.f32 %v1051, 20.0
        %v1252 = vsub.f32 %v1052, 20.0
        %v1253 = vsub.f32 %v1053, 20.0
        %v1254 = vsub.f32 %v1054, 20.0
        %v1255 = vsub.f32 %v1055, 20.0
        %v1256 = vsub.f32 %v1056, 20.0
        %v1257 = vsub.f32 %v1057, 20.0
        %v1258 = vsub.f32 %v1058, 20.0
        %v1259 = vsub.f32 %v1059, 20.0
        %v1260 = vsub.f32 %v1060, 20.0
        %v1261 = vsub.f32 %v1061, 20.0
        %v1262 = vsub.f32 %v1062, 20.0
        %v1263 = vsub.f32 %v1063, 20.0
        %v1264 = vsub.f32 %v1064, 20.0
        %v1265 = vsub.f32 %v1065, 20.0
        %v1266 = vsub.f32 %v1066, 20.0
        %v1267 = vsub.f32 %v1067, 20.0
        %v1268 = vsub.f32 %v1068, 20.0
        %v1269 = vsub.f32 %v1069, 20.0
        %v1270 = vsub.f32 %v1070, 20.0
        %v1271 = vsub.f32 %v1071, 20.0
        %v1272 = vsub.f32 %v1072, 20.0
        %v1273 = vsub.f32 %v1073, 20.0
        %v1274 = vsub.f32 %v1074, 20.0
        %v1275 = vsub.f32 %v1075, 20.0
        %v1276 = vsub.f32 %v1076, 20.0
        %v1277 = vsub.f32 %v1077, 20.0
        %v1278 = vsub.f32 %v1078, 20.0
        %v1279 = vsub.f32 %v1079, 20.0
        %v1280 = vsub.f32 %v1080, 20.0
        %v1281 = vsub.f32 %v1081, 20.0
        %v1282 = vsub.f32 %v1082, 20.0
        %v1283 = vsub.f32 %v1083, 20.0
        %v1284 = vsub.f32 %v1084, 20.0
        %v1285 = vsub.f32 %v1085, 20.0
        %v1286 = vsub.f32 %v1086, 20.0
        %v1287 = vsub.f32 %v1087, 20.0
        %v1288 = vsub.f32 %v1088, 20.0
        %v1289 = vsub.f32 %v1089, 20.0
        %v1290 = vsub.f32 %v1090, 20.0
        %v1291 = vsub.f32 %v1091, 20.0
        %v1292 = vsub.f32 %v1092, 20.0
        %v1293 = vsub.f32 %v1093, 20.0
        %v1294 = vsub.f32 %v1094, 20.0
        %v1295 = vsub.f32 %v1095, 20.0
        %v1296 = vsub.f32 %v1096, 20.0
        %v1297 = vsub.f32 %v1097, 20.0
        %v1298 = vsub.f32 %v1098, 20.0
        %v1299 = vsub.f32 %v1099, 20.0
        %v1300 = vsub.f32 %v1100, 20.0
        %v1301 = vsub.f32 %v1101, 20.0
        %v1302 = vsub.f32 %v1102, 20.0
        %v1303 = vsub.f32 %v1103, 20.0
        %v1304 = vsub.f32 %v1104, 20.0
        %v1305 = vsub.f32 %v1105, 20.0
        %v1306 = vsub.f32 %v1106, 20.0
        %v1307 = vsub.f32 %v1107, 20.0
        %v1308 = vsub.f32 %v1108, 20.0
        %v1309 = vsub.f32 %v1109, 20.0
        %v1310 = vsub.f32 %v1110, 20.0
        %v1311 = vsub.f32 %v1111, 20.0
        %v1312 = vsub.f32 %v1112, 20.0
        %v1313 = vsub.f32 %v1113, 20.0
        %v1314 = vsub.f32 %v1114, 20.0
        %v1315 = vsub.f32 %v1115, 20.0
        %v1316 = vsub.f32 %v1116, 20.0
        %v1317 = vsub.f32 %v1117, 20.0
        %v1318 = vsub.f32 %v1118, 20.0
        %v1319 = vsub.f32 %v1119, 20.0
        %v1320 = vsub.f32 %v1120, 20.0
        %v1321 = vsub.f32 %v1121, 20.0
        %v1322 = vsub.f32 %v1122, 20.0
        %v1323 = vsub.f32 %v1123, 20.0
        %v1324 = vsub.f32 %v1124, 20.0
        %v1325 = vsub.f32 %v1125, 20.0
        %v1326 = vsub.f32 %v1126, 20.0
        %v1327 = vsub.f32 %v1127, 20.0
        %v1328 = vsub.f32 %v1128, 20.0
        %v1329 = vsub.f32 %v1129, 20.0
        %v1330 = vsub.f32 %v1130, 20.0
        %v1331 = vsub.f32 %v1131, 20.0
        %v1332 = vsub.f32 %v1132, 20.0
        %v1333 = vsub.f32 %v1133, 20.0
        %v1334 = vsub.f32 %v1134, 20.0
        %v1335 = vsub.f32 %v1135, 20.0
        %v1336 = vsub.f32 %v1136, 20.0
        %v1337 = vsub.f32 %v1137, 20.0
        %v1338 = vsub.f32 %v1138, 20.0
        %v1339 = vsub.f32 %v1139, 20.0
        %v1340 = vmul.f32 %v1212, 1.442695
        %v1341 = vpow.pop %v1340
        %v1342 = vmul.f32 %v1213, 1.442695
        %v1343 = vpow.pop %v1342
        %v1344 = vmul.f32 %v1214, 1.442695
        %v1345 = vpow.pop %v1344
        %v1346 = vmul.f32 %v1215, 1.442695
        %v1347 = vpow.pop %v1346
        %v1348 = vmul.f32 %v1216, 1.442695
        %v1349 = vpow.pop %v1348
        %v1350 = vmul.f32 %v1217, 1.442695
        %v1351 = vpow.pop %v1350
        %v1352 = vmul.f32 %v1218, 1.442695
        %v1353 = vpow.pop %v1352
        %v1354 = vmul.f32 %v1219, 1.442695
        %v1355 = vpow.pop %v1354
        %v1356 = vmul.f32 %v1220, 1.442695
        %v1357 = vpow.pop %v1356
        %v1358 = vmul.f32 %v1221, 1.442695
        %v1359 = vpow.pop %v1358
        %v1360 = vmul.f32 %v1222, 1.442695
        %v1361 = vpow.pop %v1360
        %v1362 = vmul.f32 %v1223, 1.442695
        %v1363 = vpow.pop %v1362
        %v1364 = vmul.f32 %v1224, 1.442695
        %v1365 = vpow.pop %v1364
        %v1366 = vmul.f32 %v1225, 1.442695
        %v1367 = vpow.pop %v1366
        %v1368 = vmul.f32 %v1226, 1.442695
        %v1369 = vpow.pop %v1368
        %v1370 = vmul.f32 %v1227, 1.442695
        %v1371 = vpow.pop %v1370
        %v1372 = vmul.f32 %v1228, 1.442695
        %v1373 = vpow.pop %v1372
        %v1374 = vmul.f32 %v1229, 1.442695
        %v1375 = vpow.pop %v1374
        %v1376 = vmul.f32 %v1230, 1.442695
        %v1377 = vpow.pop %v1376
        %v1378 = vmul.f32 %v1231, 1.442695
        %v1379 = vpow.pop %v1378
        %v1380 = vmul.f32 %v1232, 1.442695
        %v1381 = vpow.pop %v1380
        %v1382 = vmul.f32 %v1233, 1.442695
        %v1383 = vpow.pop %v1382
        %v1384 = vmul.f32 %v1234, 1.442695
        %v1385 = vpow.pop %v1384
        %v1386 = vmul.f32 %v1235, 1.442695
        %v1387 = vpow.pop %v1386
        %v1388 = vmul.f32 %v1236, 1.442695
        %v1389 = vpow.pop %v1388
        %v1390 = vmul.f32 %v1237, 1.442695
        %v1391 = vpow.pop %v1390
        %v1392 = vmul.f32 %v1238, 1.442695
        %v1393 = vpow.pop %v1392
        %v1394 = vmul.f32 %v1239, 1.442695
        %v1395 = vpow.pop %v1394
        %v1396 = vmul.f32 %v1240, 1.442695
        %v1397 = vpow.pop %v1396
        %v1398 = vmul.f32 %v1241, 1.442695
        %v1399 = vpow.pop %v1398
        %v1400 = vmul.f32 %v1242, 1.442695
        %v1401 = vpow.pop %v1400
        %v1402 = vmul.f32 %v1243, 1.442695
        %v1403 = vpow.pop %v1402
        %v1404 = vmul.f32 %v1244, 1.442695
        %v1405 = vpow.pop %v1404
        %v1406 = vmul.f32 %v1245, 1.442695
        %v1407 = vpow.pop %v1406
        %v1408 = vmul.f32 %v1246, 1.442695
        %v1409 = vpow.pop %v1408
        %v1410 = vmul.f32 %v1247, 1.442695
        %v1411 = vpow.pop %v1410
        %v1412 = vmul.f32 %v1248, 1.442695
        %v1413 = vpow.pop %v1412
        %v1414 = vmul.f32 %v1249, 1.442695
        %v1415 = vpow.pop %v1414
        %v1416 = vmul.f32 %v1250, 1.442695
        %v1417 = vpow.pop %v1416
        %v1418 = vmul.f32 %v1251, 1.442695
        %v1419 = vpow.pop %v1418
        %v1420 = vmul.f32 %v1252, 1.442695
        %v1421 = vpow.pop %v1420
        %v1422 = vmul.f32 %v1253, 1.442695
        %v1423 = vpow.pop %v1422
        %v1424 = vmul.f32 %v1254, 1.442695
        %v1425 = vpow.pop %v1424
        %v1426 = vmul.f32 %v1255, 1.442695
        %v1427 = vpow.pop %v1426
        %v1428 = vmul.f32 %v1256, 1.442695
        %v1429 = vpow.pop %v1428
        %v1430 = vmul.f32 %v1257, 1.442695
        %v1431 = vpow.pop %v1430
        %v1432 = vmul.f32 %v1258, 1.442695
        %v1433 = vpow.pop %v1432
        %v1434 = vmul.f32 %v1259, 1.442695
        %v1435 = vpow.pop %v1434
        %v1436 = vmul.f32 %v1260, 1.442695
        %v1437 = vpow.pop %v1436
        %v1438 = vmul.f32 %v1261, 1.442695
        %v1439 = vpow.pop %v1438
        %v1440 = vmul.f32 %v1262, 1.442695
        %v1441 = vpow.pop %v1440
        %v1442 = vmul.f32 %v1263, 1.442695
        %v1443 = vpow.pop %v1442
        %v1444 = vmul.f32 %v1264, 1.442695
        %v1445 = vpow.pop %v1444
        %v1446 = vmul.f32 %v1265, 1.442695
        %v1447 = vpow.pop %v1446
        %v1448 = vmul.f32 %v1266, 1.442695
        %v1449 = vpow.pop %v1448
        %v1450 = vmul.f32 %v1267, 1.442695
        %v1451 = vpow.pop %v1450
        %v1452 = vmul.f32 %v1268, 1.442695
        %v1453 = vpow.pop %v1452
        %v1454 = vmul.f32 %v1269, 1.442695
        %v1455 = vpow.pop %v1454
        %v1456 = vmul.f32 %v1270, 1.442695
        %v1457 = vpow.pop %v1456
        %v1458 = vmul.f32 %v1271, 1.442695
        %v1459 = vpow.pop %v1458
        %v1460 = vmul.f32 %v1272, 1.442695
        %v1461 = vpow.pop %v1460
        %v1462 = vmul.f32 %v1273, 1.442695
        %v1463 = vpow.pop %v1462
        %v1464 = vmul.f32 %v1274, 1.442695
        %v1465 = vpow.pop %v1464
        %v1466 = vmul.f32 %v1275, 1.442695
        %v1467 = vpow.pop %v1466
        %v1468 = vmul.f32 %v1276, 1.442695
        %v1469 = vpow.pop %v1468
        %v1470 = vmul.f32 %v1277, 1.442695
        %v1471 = vpow.pop %v1470
        %v1472 = vmul.f32 %v1278, 1.442695
        %v1473 = vpow.pop %v1472
        %v1474 = vmul.f32 %v1279, 1.442695
        %v1475 = vpow.pop %v1474
        %v1476 = vmul.f32 %v1280, 1.442695
        %v1477 = vpow.pop %v1476
        %v1478 = vmul.f32 %v1281, 1.442695
        %v1479 = vpow.pop %v1478
        %v1480 = vmul.f32 %v1282, 1.442695
        %v1481 = vpow.pop %v1480
        %v1482 = vmul.f32 %v1283, 1.442695
        %v1483 = vpow.pop %v1482
        %v1484 = vmul.f32 %v1284, 1.442695
        %v1485 = vpow.pop %v1484
        %v1486 = vmul.f32 %v1285, 1.442695
        %v1487 = vpow.pop %v1486
        %v1488 = vmul.f32 %v1286, 1.442695
        %v1489 = vpow.pop %v1488
        %v1490 = vmul.f32 %v1287, 1.442695
        %v1491 = vpow.pop %v1490
        %v1492 = vmul.f32 %v1288, 1.442695
        %v1493 = vpow.pop %v1492
        %v1494 = vmul.f32 %v1289, 1.442695
        %v1495 = vpow.pop %v1494
        %v1496 = vmul.f32 %v1290, 1.442695
        %v1497 = vpow.pop %v1496
        %v1498 = vmul.f32 %v1291, 1.442695
        %v1499 = vpow.pop %v1498
        %v1500 = vmul.f32 %v1292, 1.442695
        %v1501 = vpow.pop %v1500
        %v1502 = vmul.f32 %v1293, 1.442695
        %v1503 = vpow.pop %v1502
        %v1504 = vmul.f32 %v1294, 1.442695
        %v1505 = vpow.pop %v1504
        %v1506 = vmul.f32 %v1295, 1.442695
        %v1507 = vpow.pop %v1506
        %v1508 = vmul.f32 %v1296, 1.442695
        %v1509 = vpow.pop %v1508
        %v1510 = vmul.f32 %v1297, 1.442695
        %v1511 = vpow.pop %v1510
        %v1512 = vmul.f32 %v1298, 1.442695
        %v1513 = vpow.pop %v1512
        %v1514 = vmul.f32 %v1299, 1.442695
        %v1515 = vpow.pop %v1514
        %v1516 = vmul.f32 %v1300, 1.442695
        %v1517 = vpow.pop %v1516
        %v1518 = vmul.f32 %v1301, 1.442695
        %v1519 = vpow.pop %v1518
        %v1520 = vmul.f32 %v1302, 1.442695
        %v1521 = vpow.pop %v1520
        %v1522 = vmul.f32 %v1303, 1.442695
        %v1523 = vpow.pop %v1522
        %v1524 = vmul.f32 %v1304, 1.442695
        %v1525 = vpow.pop %v1524
        %v1526 = vmul.f32 %v1305, 1.442695
        %v1527 = vpow.pop %v1526
        %v1528 = vmul.f32 %v1306, 1.442695
        %v1529 = vpow.pop %v1528
        %v1530 = vmul.f32 %v1307, 1.442695
        %v1531 = vpow.pop %v1530
        %v1532 = vmul.f32 %v1308, 1.442695
        %v1533 = vpow.pop %v1532
        %v1534 = vmul.f32 %v1309, 1.442695
        %v1535 = vpow.pop %v1534
        %v1536 = vmul.f32 %v1310, 1.442695
        %v1537 = vpow.pop %v1536
        %v1538 = vmul.f32 %v1311, 1.442695
        %v1539 = vpow.pop %v1538
        %v1540 = vmul.f32 %v1312, 1.442695
        %v1541 = vpow.pop %v1540
        %v1542 = vmul.f32 %v1313, 1.442695
        %v1543 = vpow.pop %v1542
        %v1544 = vmul.f32 %v1314, 1.442695
        %v1545 = vpow.pop %v1544
        %v1546 = vmul.f32 %v1315, 1.442695
        %v1547 = vpow.pop %v1546
        %v1548 = vmul.f32 %v1316, 1.442695
        %v1549 = vpow.pop %v1548
        %v1550 = vmul.f32 %v1317, 1.442695
        %v1551 = vpow.pop %v1550
        %v1552 = vmul.f32 %v1318, 1.442695
        %v1553 = vpow.pop %v1552
        %v1554 = vmul.f32 %v1319, 1.442695
        %v1555 = vpow.pop %v1554
        %v1556 = vmul.f32 %v1320, 1.442695
        %v1557 = vpow.pop %v1556
        %v1558 = vmul.f32 %v1321, 1.442695
        %v1559 = vpow.pop %v1558
        %v1560 = vmul.f32 %v1322, 1.442695
        %v1561 = vpow.pop %v1560
        %v1562 = vmul.f32 %v1323, 1.442695
        %v1563 = vpow.pop %v1562
        %v1564 = vmul.f32 %v1324, 1.442695
        %v1565 = vpow.pop %v1564
        %v1566 = vmul.f32 %v1325, 1.442695
        %v1567 = vpow.pop %v1566
        %v1568 = vmul.f32 %v1326, 1.442695
        %v1569 = vpow.pop %v1568
        %v1570 = vmul.f32 %v1327, 1.442695
        %v1571 = vpow.pop %v1570
        %v1572 = vmul.f32 %v1328, 1.442695
        %v1573 = vpow.pop %v1572
        %v1574 = vmul.f32 %v1329, 1.442695
        %v1575 = vpow.pop %v1574
        %v1576 = vmul.f32 %v1330, 1.442695
        %v1577 = vpow.pop %v1576
        %v1578 = vmul.f32 %v1331, 1.442695
        %v1579 = vpow.pop %v1578
        %v1580 = vmul.f32 %v1332, 1.442695
        %v1581 = vpow.pop %v1580
        %v1582 = vmul.f32 %v1333, 1.442695
        %v1583 = vpow.pop %v1582
        %v1584 = vmul.f32 %v1334, 1.442695
        %v1585 = vpow.pop %v1584
        %v1586 = vmul.f32 %v1335, 1.442695
        %v1587 = vpow.pop %v1586
        %v1588 = vmul.f32 %v1336, 1.442695
        %v1589 = vpow.pop %v1588
        %v1590 = vmul.f32 %v1337, 1.442695
        %v1591 = vpow.pop %v1590
        %v1592 = vmul.f32 %v1338, 1.442695
        %v1593 = vpow.pop %v1592
        %v1594 = vmul.f32 %v1339, 1.442695
        %v1595 = vpow.pop %v1594
        %vm1596 = vcmp.eq.s32.totalorder %v1208, %v1175
        %vm1597 = vcmp.eq.s32.totalorder %v1209, %v1175
        %vm1598 = vcmp.eq.s32.totalorder %v1210, %v1175
        %vm1599 = vcmp.eq.s32.totalorder %v1211, %v1175
        %vm1600 = vcmp.eq.s32.totalorder %v1208, %v1176
        %vm1601 = vcmp.eq.s32.totalorder %v1209, %v1176
        %vm1602 = vcmp.eq.s32.totalorder %v1210, %v1176
        %vm1603 = vcmp.eq.s32.totalorder %v1211, %v1176
        %vm1604 = vcmp.eq.s32.totalorder %v1208, %v1177
        %vm1605 = vcmp.eq.s32.totalorder %v1209, %v1177
        %vm1606 = vcmp.eq.s32.totalorder %v1210, %v1177
        %vm1607 = vcmp.eq.s32.totalorder %v1211, %v1177
        %vm1608 = vcmp.eq.s32.totalorder %v1208, %v1178
        %vm1609 = vcmp.eq.s32.totalorder %v1209, %v1178
        %vm1610 = vcmp.eq.s32.totalorder %v1210, %v1178
        %vm1611 = vcmp.eq.s32.totalorder %v1211, %v1178
        %vm1612 = vcmp.eq.s32.totalorder %v1208, %v1179
        %vm1613 = vcmp.eq.s32.totalorder %v1209, %v1179
        %vm1614 = vcmp.eq.s32.totalorder %v1210, %v1179
        %vm1615 = vcmp.eq.s32.totalorder %v1211, %v1179
        %vm1616 = vcmp.eq.s32.totalorder %v1208, %v1180
        %vm1617 = vcmp.eq.s32.totalorder %v1209, %v1180
        %vm1618 = vcmp.eq.s32.totalorder %v1210, %v1180
        %vm1619 = vcmp.eq.s32.totalorder %v1211, %v1180
        %vm1620 = vcmp.eq.s32.totalorder %v1208, %v1181
        %vm1621 = vcmp.eq.s32.totalorder %v1209, %v1181
        %vm1622 = vcmp.eq.s32.totalorder %v1210, %v1181
        %vm1623 = vcmp.eq.s32.totalorder %v1211, %v1181
        %vm1624 = vcmp.eq.s32.totalorder %v1208, %v1182
        %vm1625 = vcmp.eq.s32.totalorder %v1209, %v1182
        %vm1626 = vcmp.eq.s32.totalorder %v1210, %v1182
        %vm1627 = vcmp.eq.s32.totalorder %v1211, %v1182
        %vm1628 = vcmp.eq.s32.totalorder %v1208, %v1183
        %vm1629 = vcmp.eq.s32.totalorder %v1209, %v1183
        %vm1630 = vcmp.eq.s32.totalorder %v1210, %v1183
        %vm1631 = vcmp.eq.s32.totalorder %v1211, %v1183
        %vm1632 = vcmp.eq.s32.totalorder %v1208, %v1184
        %vm1633 = vcmp.eq.s32.totalorder %v1209, %v1184
        %vm1634 = vcmp.eq.s32.totalorder %v1210, %v1184
        %vm1635 = vcmp.eq.s32.totalorder %v1211, %v1184
        %vm1636 = vcmp.eq.s32.totalorder %v1208, %v1185
        %vm1637 = vcmp.eq.s32.totalorder %v1209, %v1185
        %vm1638 = vcmp.eq.s32.totalorder %v1210, %v1185
        %vm1639 = vcmp.eq.s32.totalorder %v1211, %v1185
        %vm1640 = vcmp.eq.s32.totalorder %v1208, %v1186
        %vm1641 = vcmp.eq.s32.totalorder %v1209, %v1186
        %vm1642 = vcmp.eq.s32.totalorder %v1210, %v1186
        %vm1643 = vcmp.eq.s32.totalorder %v1211, %v1186
        %vm1644 = vcmp.eq.s32.totalorder %v1208, %v1187
        %vm1645 = vcmp.eq.s32.totalorder %v1209, %v1187
        %vm1646 = vcmp.eq.s32.totalorder %v1210, %v1187
        %vm1647 = vcmp.eq.s32.totalorder %v1211, %v1187
        %vm1648 = vcmp.eq.s32.totalorder %v1208, %v1188
        %vm1649 = vcmp.eq.s32.totalorder %v1209, %v1188
        %vm1650 = vcmp.eq.s32.totalorder %v1210, %v1188
        %vm1651 = vcmp.eq.s32.totalorder %v1211, %v1188
        %vm1652 = vcmp.eq.s32.totalorder %v1208, %v1189
        %vm1653 = vcmp.eq.s32.totalorder %v1209, %v1189
        %vm1654 = vcmp.eq.s32.totalorder %v1210, %v1189
        %vm1655 = vcmp.eq.s32.totalorder %v1211, %v1189
        %vm1656 = vcmp.eq.s32.totalorder %v1208, %v1190
        %vm1657 = vcmp.eq.s32.totalorder %v1209, %v1190
        %vm1658 = vcmp.eq.s32.totalorder %v1210, %v1190
        %vm1659 = vcmp.eq.s32.totalorder %v1211, %v1190
        %vm1660 = vcmp.eq.s32.totalorder %v1208, %v1191
        %vm1661 = vcmp.eq.s32.totalorder %v1209, %v1191
        %vm1662 = vcmp.eq.s32.totalorder %v1210, %v1191
        %vm1663 = vcmp.eq.s32.totalorder %v1211, %v1191
        %vm1664 = vcmp.eq.s32.totalorder %v1208, %v1192
        %vm1665 = vcmp.eq.s32.totalorder %v1209, %v1192
        %vm1666 = vcmp.eq.s32.totalorder %v1210, %v1192
        %vm1667 = vcmp.eq.s32.totalorder %v1211, %v1192
        %vm1668 = vcmp.eq.s32.totalorder %v1208, %v1193
        %vm1669 = vcmp.eq.s32.totalorder %v1209, %v1193
        %vm1670 = vcmp.eq.s32.totalorder %v1210, %v1193
        %vm1671 = vcmp.eq.s32.totalorder %v1211, %v1193
        %vm1672 = vcmp.eq.s32.totalorder %v1208, %v1194
        %vm1673 = vcmp.eq.s32.totalorder %v1209, %v1194
        %vm1674 = vcmp.eq.s32.totalorder %v1210, %v1194
        %vm1675 = vcmp.eq.s32.totalorder %v1211, %v1194
        %vm1676 = vcmp.eq.s32.totalorder %v1208, %v1195
        %vm1677 = vcmp.eq.s32.totalorder %v1209, %v1195
        %vm1678 = vcmp.eq.s32.totalorder %v1210, %v1195
        %vm1679 = vcmp.eq.s32.totalorder %v1211, %v1195
        %vm1680 = vcmp.eq.s32.totalorder %v1208, %v1196
        %vm1681 = vcmp.eq.s32.totalorder %v1209, %v1196
        %vm1682 = vcmp.eq.s32.totalorder %v1210, %v1196
        %vm1683 = vcmp.eq.s32.totalorder %v1211, %v1196
        %vm1684 = vcmp.eq.s32.totalorder %v1208, %v1197
        %vm1685 = vcmp.eq.s32.totalorder %v1209, %v1197
        %vm1686 = vcmp.eq.s32.totalorder %v1210, %v1197
        %vm1687 = vcmp.eq.s32.totalorder %v1211, %v1197
        %vm1688 = vcmp.eq.s32.totalorder %v1208, %v1198
        %vm1689 = vcmp.eq.s32.totalorder %v1209, %v1198
        %vm1690 = vcmp.eq.s32.totalorder %v1210, %v1198
        %vm1691 = vcmp.eq.s32.totalorder %v1211, %v1198
        %vm1692 = vcmp.eq.s32.totalorder %v1208, %v1199
        %vm1693 = vcmp.eq.s32.totalorder %v1209, %v1199
        %vm1694 = vcmp.eq.s32.totalorder %v1210, %v1199
        %vm1695 = vcmp.eq.s32.totalorder %v1211, %v1199
        %vm1696 = vcmp.eq.s32.totalorder %v1208, %v1200
        %vm1697 = vcmp.eq.s32.totalorder %v1209, %v1200
        %vm1698 = vcmp.eq.s32.totalorder %v1210, %v1200
        %vm1699 = vcmp.eq.s32.totalorder %v1211, %v1200
        %vm1700 = vcmp.eq.s32.totalorder %v1208, %v1201
        %vm1701 = vcmp.eq.s32.totalorder %v1209, %v1201
        %vm1702 = vcmp.eq.s32.totalorder %v1210, %v1201
        %vm1703 = vcmp.eq.s32.totalorder %v1211, %v1201
        %vm1704 = vcmp.eq.s32.totalorder %v1208, %v1202
        %vm1705 = vcmp.eq.s32.totalorder %v1209, %v1202
        %vm1706 = vcmp.eq.s32.totalorder %v1210, %v1202
        %vm1707 = vcmp.eq.s32.totalorder %v1211, %v1202
        %vm1708 = vcmp.eq.s32.totalorder %v1208, %v1203
        %vm1709 = vcmp.eq.s32.totalorder %v1209, %v1203
        %vm1710 = vcmp.eq.s32.totalorder %v1210, %v1203
        %vm1711 = vcmp.eq.s32.totalorder %v1211, %v1203
        %vm1712 = vcmp.eq.s32.totalorder %v1208, %v1204
        %vm1713 = vcmp.eq.s32.totalorder %v1209, %v1204
        %vm1714 = vcmp.eq.s32.totalorder %v1210, %v1204
        %vm1715 = vcmp.eq.s32.totalorder %v1211, %v1204
        %vm1716 = vcmp.eq.s32.totalorder %v1208, %v1205
        %vm1717 = vcmp.eq.s32.totalorder %v1209, %v1205
        %vm1718 = vcmp.eq.s32.totalorder %v1210, %v1205
        %vm1719 = vcmp.eq.s32.totalorder %v1211, %v1205
        %vm1720 = vcmp.eq.s32.totalorder %v1208, %v1206
        %vm1721 = vcmp.eq.s32.totalorder %v1209, %v1206
        %vm1722 = vcmp.eq.s32.totalorder %v1210, %v1206
        %vm1723 = vcmp.eq.s32.totalorder %v1211, %v1206
        %v1724 = vld [vmem:[#allocation2] sm:$0xf]
        %v1725 = vadd.f32 %v1341, %v1349
        %v1726 = vadd.f32 %v1725, %v1357
        %v1727 = vadd.f32 %v1726, %v1365
        %v1728 = vadd.f32 %v1727, %v1373
        %v1729 = vadd.f32 %v1728, %v1381
        %v1730 = vadd.f32 %v1729, %v1389
        %v1731 = vadd.f32 %v1730, %v1397
        %v1732 = vadd.f32 %v1731, %v1405
        %v1733 = vadd.f32 %v1732, %v1413
        %v1734 = vadd.f32 %v1733, %v1421
        %v1735 = vadd.f32 %v1734, %v1429
        %v1736 = vadd.f32 %v1735, %v1437
        %v1737 = vadd.f32 %v1736, %v1445
        %v1738 = vadd.f32 %v1737, %v1453
        %v1739 = vadd.f32 %v1738, %v1461
        %v1740 = vadd.f32 %v1739, %v1469
        %v1741 = vadd.f32 %v1740, %v1477
        %v1742 = vadd.f32 %v1741, %v1485
        %v1743 = vadd.f32 %v1742, %v1493
        %v1744 = vadd.f32 %v1743, %v1501
        %v1745 = vadd.f32 %v1744, %v1509
        %v1746 = vadd.f32 %v1745, %v1517
        %v1747 = vadd.f32 %v1746, %v1525
        %v1748 = vadd.f32 %v1747, %v1533
        %v1749 = vadd.f32 %v1748, %v1541
        %v1750 = vadd.f32 %v1749, %v1549
        %v1751 = vadd.f32 %v1750, %v1557
        %v1752 = vadd.f32 %v1751, %v1565
        %v1753 = vadd.f32 %v1752, %v1573
        %v1754 = vadd.f32 %v1753, %v1581
        %v1755 = vadd.f32 %v1754, %v1589
        %v1756 = vrot.slane %v1755, 4
        %v1757 = vadd.f32 %v1755, %v1756
        %v1758 = vrot.slane %v1757, 2
        %v1759 = vadd.f32 %v1757, %v1758
        %v1760 = vrot.slane %v1759, 1
        %v1761 = vadd.f32 %v1759, %v1760
        %v1762 = vadd.f32 %v1343, %v1351
        %v1763 = vadd.f32 %v1762, %v1359
        %v1764 = vadd.f32 %v1763, %v1367
        %v1765 = vadd.f32 %v1764, %v1375
        %v1766 = vadd.f32 %v1765, %v1383
        %v1767 = vadd.f32 %v1766, %v1391
        %v1768 = vadd.f32 %v1767, %v1399
        %v1769 = vadd.f32 %v1768, %v1407
        %v1770 = vadd.f32 %v1769, %v1415
        %v1771 = vadd.f32 %v1770, %v1423
        %v1772 = vadd.f32 %v1771, %v1431
        %v1773 = vadd.f32 %v1772, %v1439
        %v1774 = vadd.f32 %v1773, %v1447
        %v1775 = vadd.f32 %v1774, %v1455
        %v1776 = vadd.f32 %v1775, %v1463
        %v1777 = vadd.f32 %v1776, %v1471
        %v1778 = vadd.f32 %v1777, %v1479
        %v1779 = vadd.f32 %v1778, %v1487
        %v1780 = vadd.f32 %v1779, %v1495
        %v1781 = vadd.f32 %v1780, %v1503
        %v1782 = vadd.f32 %v1781, %v1511
        %v1783 = vadd.f32 %v1782, %v1519
        %v1784 = vadd.f32 %v1783, %v1527
        %v1785 = vadd.f32 %v1784, %v1535
        %v1786 = vadd.f32 %v1785, %v1543
        %v1787 = vadd.f32 %v1786, %v1551
        %v1788 = vadd.f32 %v1787, %v1559
        %v1789 = vadd.f32 %v1788, %v1567
        %v1790 = vadd.f32 %v1789, %v1575
        %v1791 = vadd.f32 %v1790, %v1583
        %v1792 = vadd.f32 %v1791, %v1591
        %v1793 = vrot.slane %v1792, 4
        %v1794 = vadd.f32 %v1792, %v1793
        %v1795 = vrot.slane %v1794, 2
        %v1796 = vadd.f32 %v1794, %v1795
        %v1797 = vrot.slane %v1796, 1
        %v1798 = vadd.f32 %v1796, %v1797
        %v1799 = vadd.f32 %v1345, %v1353
        %v1800 = vadd.f32 %v1799, %v1361
        %v1801 = vadd.f32 %v1800, %v1369
        %v1802 = vadd.f32 %v1801, %v1377
        %v1803 = vadd.f32 %v1802, %v1385
        %v1804 = vadd.f32 %v1803, %v1393
        %v1805 = vadd.f32 %v1804, %v1401
        %v1806 = vadd.f32 %v1805, %v1409
        %v1807 = vadd.f32 %v1806, %v1417
        %v1808 = vadd.f32 %v1807, %v1425
        %v1809 = vadd.f32 %v1808, %v1433
        %v1810 = vadd.f32 %v1809, %v1441
        %v1811 = vadd.f32 %v1810, %v1449
        %v1812 = vadd.f32 %v1811, %v1457
        %v1813 = vadd.f32 %v1812, %v1465
        %v1814 = vadd.f32 %v1813, %v1473
        %v1815 = vadd.f32 %v1814, %v1481
        %v1816 = vadd.f32 %v1815, %v1489
        %v1817 = vadd.f32 %v1816, %v1497
        %v1818 = vadd.f32 %v1817, %v1505
        %v1819 = vadd.f32 %v1818, %v1513
        %v1820 = vadd.f32 %v1819, %v1521
        %v1821 = vadd.f32 %v1820, %v1529
        %v1822 = vadd.f32 %v1821, %v1537
        %v1823 = vadd.f32 %v1822, %v1545
        %v1824 = vadd.f32 %v1823, %v1553
        %v1825 = vadd.f32 %v1824, %v1561
        %v1826 = vadd.f32 %v1825, %v1569
        %v1827 = vadd.f32 %v1826, %v1577
        %v1828 = vadd.f32 %v1827, %v1585
        %v1829 = vadd.f32 %v1828, %v1593
        %v1830 = vrot.slane %v1829, 4
        %v1831 = vadd.f32 %v1829, %v1830
        %v1832 = vrot.slane %v1831, 2
        %v1833 = vadd.f32 %v1831, %v1832
        %v1834 = vrot.slane %v1833, 1
        %v1835 = vadd.f32 %v1833, %v1834
        %v1836 = vadd.f32 %v1347, %v1355
        %v1837 = vadd.f32 %v1836, %v1363
        %v1838 = vadd.f32 %v1837, %v1371
        %v1839 = vadd.f32 %v1838, %v1379
        %v1840 = vadd.f32 %v1839, %v1387
        %v1841 = vadd.f32 %v1840, %v1395
        %v1842 = vadd.f32 %v1841, %v1403
        %v1843 = vadd.f32 %v1842, %v1411
        %v1844 = vadd.f32 %v1843, %v1419
        %v1845 = vadd.f32 %v1844, %v1427
        %v1846 = vadd.f32 %v1845, %v1435
        %v1847 = vadd.f32 %v1846, %v1443
        %v1848 = vadd.f32 %v1847, %v1451
        %v1849 = vadd.f32 %v1848, %v1459
        %v1850 = vadd.f32 %v1849, %v1467
        %v1851 = vadd.f32 %v1850, %v1475
        %v1852 = vadd.f32 %v1851, %v1483
        %v1853 = vadd.f32 %v1852, %v1491
        %v1854 = vadd.f32 %v1853, %v1499
        %v1855 = vadd.f32 %v1854, %v1507
        %v1856 = vadd.f32 %v1855, %v1515
        %v1857 = vadd.f32 %v1856, %v1523
        %v1858 = vadd.f32 %v1857, %v1531
        %v1859 = vadd.f32 %v1858, %v1539
        %v1860 = vadd.f32 %v1859, %v1547
        %v1861 = vadd.f32 %v1860, %v1555
        %v1862 = vadd.f32 %v1861, %v1563
        %v1863 = vadd.f32 %v1862, %v1571
        %v1864 = vadd.f32 %v1863, %v1579
        %v1865 = vadd.f32 %v1864, %v1587
        %v1866 = vadd.f32 %v1865, %v1595
        %v1867 = vrot.slane %v1866, 4
        %v1868 = vadd.f32 %v1866, %v1867
        %v1869 = vrot.slane %v1868, 2
        %v1870 = vadd.f32 %v1868, %v1869
        %v1871 = vrot.slane %v1870, 1
        %v1872 = vadd.f32 %v1870, %v1871
        %v1877 = vcombine.low %v1761, %v1798
        %v1878 = vcombine.low %v1835, %v1872
        %v1880 = vunpack.c.l.s4 1966171168
        %v1881 = vunpack.c.0.s8 %v1880
        %v1882 = vlaneseq
        %v1883 = vshrl.u32 %v1882, 7
        %v1884 = vsub.s32 %v1881, %v1883
        %v1885 = vrot.slane %v1877, %v1884
        %v1887 = vunpack.c.l.s4 1966171168
        %v1888 = vunpack.c.0.s8 %v1887
        %v1889 = vlaneseq
        %v1890 = vshrl.u32 %v1889, 7
        %v1891 = vsub.s32 %v1888, %v1890
        %v1892 = vrot.slane %v1878, %v1891
        %v1893 = vcombine.low %v1885, %v1892
        %v1895 = vunpack.c.l.s4 1966171168
        %v1896 = vunpack.c.0.s8 %v1895
        %v1897 = vlaneseq
        %v1898 = vshrl.u32 %v1897, 7
        %v1899 = vsub.s32 %v1896, %v1898
        %v1900 = vrot.slane %v1893, %v1899
        %v1902 = vadd.f32 %v1724, %v1900
        %v1903 = vlaneseq
        %vm1904 = vcmp.ge.s32.totalorder %v1903, 0
        %vm1905 = vcmp.lt.s32.totalorder %v1903, 512
        %vm1906 = vmand %vm1904, %vm1905
        %1907 = vst.msk [vmem:[#allocation2] sm:$0xf] %vm1906, %v1902
        %v1908 = vadd.f32 %v1341, %v1343
        %v1909 = vadd.f32 %v1908, %v1345
        %v1910 = vadd.f32 %v1909, %v1347
        %1911 = vadd.xlane.f32.xlu0 %v1910
        %v1912 = vpop.xlane.xlu0 %1911
        %v1913 = vadd.f32 %v1349, %v1351
        %v1914 = vadd.f32 %v1913, %v1353
        %v1915 = vadd.f32 %v1914, %v1355
        %1916 = vadd.xlane.f32.xlu0 %v1915
        %v1917 = vpop.xlane.xlu0 %1916
        %v1918 = vadd.f32 %v1357, %v1359
        %v1919 = vadd.f32 %v1918, %v1361
        %v1920 = vadd.f32 %v1919, %v1363
        %1921 = vadd.xlane.f32.xlu0 %v1920
        %v1922 = vpop.xlane.xlu0 %1921
        %v1923 = vadd.f32 %v1365, %v1367
        %v1924 = vadd.f32 %v1923, %v1369
        %v1925 = vadd.f32 %v1924, %v1371
        %1926 = vadd.xlane.f32.xlu0 %v1925
        %v1927 = vpop.xlane.xlu0 %1926
        %v1928 = vadd.f32 %v1373, %v1375
        %v1929 = vadd.f32 %v1928, %v1377
        %v1930 = vadd.f32 %v1929, %v1379
        %1931 = vadd.xlane.f32.xlu0 %v1930
        %v1932 = vpop.xlane.xlu0 %1931
        %v1933 = vadd.f32 %v1381, %v1383
        %v1934 = vadd.f32 %v1933, %v1385
        %v1935 = vadd.f32 %v1934, %v1387
        %1936 = vadd.xlane.f32.xlu0 %v1935
        %v1937 = vpop.xlane.xlu0 %1936
        %v1938 = vadd.f32 %v1389, %v1391
        %v1939 = vadd.f32 %v1938, %v1393
        %v1940 = vadd.f32 %v1939, %v1395
        %1941 = vadd.xlane.f32.xlu0 %v1940
        %v1942 = vpop.xlane.xlu0 %1941
        %v1943 = vadd.f32 %v1397, %v1399
        %v1944 = vadd.f32 %v1943, %v1401
        %v1945 = vadd.f32 %v1944, %v1403
        %1946 = vadd.xlane.f32.xlu0 %v1945
        %v1947 = vpop.xlane.xlu0 %1946
        %v1948 = vadd.f32 %v1405, %v1407
        %v1949 = vadd.f32 %v1948, %v1409
        %v1950 = vadd.f32 %v1949, %v1411
        %1951 = vadd.xlane.f32.xlu0 %v1950
        %v1952 = vpop.xlane.xlu0 %1951
        %v1953 = vadd.f32 %v1413, %v1415
        %v1954 = vadd.f32 %v1953, %v1417
        %v1955 = vadd.f32 %v1954, %v1419
        %1956 = vadd.xlane.f32.xlu0 %v1955
        %v1957 = vpop.xlane.xlu0 %1956
        %v1958 = vadd.f32 %v1421, %v1423
        %v1959 = vadd.f32 %v1958, %v1425
        %v1960 = vadd.f32 %v1959, %v1427
        %1961 = vadd.xlane.f32.xlu0 %v1960
        %v1962 = vpop.xlane.xlu0 %1961
        %v1963 = vadd.f32 %v1429, %v1431
        %v1964 = vadd.f32 %v1963, %v1433
        %v1965 = vadd.f32 %v1964, %v1435
        %1966 = vadd.xlane.f32.xlu0 %v1965
        %v1967 = vpop.xlane.xlu0 %1966
        %v1968 = vadd.f32 %v1437, %v1439
        %v1969 = vadd.f32 %v1968, %v1441
        %v1970 = vadd.f32 %v1969, %v1443
        %1971 = vadd.xlane.f32.xlu0 %v1970
        %v1972 = vpop.xlane.xlu0 %1971
        %v1973 = vadd.f32 %v1445, %v1447
        %v1974 = vadd.f32 %v1973, %v1449
        %v1975 = vadd.f32 %v1974, %v1451
        %1976 = vadd.xlane.f32.xlu0 %v1975
        %v1977 = vpop.xlane.xlu0 %1976
        %v1978 = vadd.f32 %v1453, %v1455
        %v1979 = vadd.f32 %v1978, %v1457
        %v1980 = vadd.f32 %v1979, %v1459
        %1981 = vadd.xlane.f32.xlu0 %v1980
        %v1982 = vpop.xlane.xlu0 %1981
        %v1983 = vadd.f32 %v1461, %v1463
        %v1984 = vadd.f32 %v1983, %v1465
        %v1985 = vadd.f32 %v1984, %v1467
        %1986 = vadd.xlane.f32.xlu0 %v1985
        %v1987 = vpop.xlane.xlu0 %1986
        %v1988 = vadd.f32 %v1469, %v1471
        %v1989 = vadd.f32 %v1988, %v1473
        %v1990 = vadd.f32 %v1989, %v1475
        %1991 = vadd.xlane.f32.xlu0 %v1990
        %v1992 = vpop.xlane.xlu0 %1991
        %v1993 = vadd.f32 %v1477, %v1479
        %v1994 = vadd.f32 %v1993, %v1481
        %v1995 = vadd.f32 %v1994, %v1483
        %1996 = vadd.xlane.f32.xlu0 %v1995
        %v1997 = vpop.xlane.xlu0 %1996
        %v1998 = vadd.f32 %v1485, %v1487
        %v1999 = vadd.f32 %v1998, %v1489
        %v2000 = vadd.f32 %v1999, %v1491
        %2001 = vadd.xlane.f32.xlu0 %v2000
        %v2002 = vpop.xlane.xlu0 %2001
        %v2003 = vadd.f32 %v1493, %v1495
        %v2004 = vadd.f32 %v2003, %v1497
        %v2005 = vadd.f32 %v2004, %v1499
        %2006 = vadd.xlane.f32.xlu0 %v2005
        %v2007 = vpop.xlane.xlu0 %2006
        %v2008 = vadd.f32 %v1501, %v1503
        %v2009 = vadd.f32 %v2008, %v1505
        %v2010 = vadd.f32 %v2009, %v1507
        %2011 = vadd.xlane.f32.xlu0 %v2010
        %v2012 = vpop.xlane.xlu0 %2011
        %v2013 = vadd.f32 %v1509, %v1511
        %v2014 = vadd.f32 %v2013, %v1513
        %v2015 = vadd.f32 %v2014, %v1515
        %2016 = vadd.xlane.f32.xlu0 %v2015
        %v2017 = vpop.xlane.xlu0 %2016
        %v2018 = vadd.f32 %v1517, %v1519
        %v2019 = vadd.f32 %v2018, %v1521
        %v2020 = vadd.f32 %v2019, %v1523
        %2021 = vadd.xlane.f32.xlu0 %v2020
        %v2022 = vpop.xlane.xlu0 %2021
        %v2023 = vadd.f32 %v1525, %v1527
        %v2024 = vadd.f32 %v2023, %v1529
        %v2025 = vadd.f32 %v2024, %v1531
        %2026 = vadd.xlane.f32.xlu0 %v2025
        %v2027 = vpop.xlane.xlu0 %2026
        %v2028 = vadd.f32 %v1533, %v1535
        %v2029 = vadd.f32 %v2028, %v1537
        %v2030 = vadd.f32 %v2029, %v1539
        %2031 = vadd.xlane.f32.xlu0 %v2030
        %v2032 = vpop.xlane.xlu0 %2031
        %v2033 = vadd.f32 %v1541, %v1543
        %v2034 = vadd.f32 %v2033, %v1545
        %v2035 = vadd.f32 %v2034, %v1547
        %2036 = vadd.xlane.f32.xlu0 %v2035
        %v2037 = vpop.xlane.xlu0 %2036
        %v2038 = vadd.f32 %v1549, %v1551
        %v2039 = vadd.f32 %v2038, %v1553
        %v2040 = vadd.f32 %v2039, %v1555
        %2041 = vadd.xlane.f32.xlu0 %v2040
        %v2042 = vpop.xlane.xlu0 %2041
        %v2043 = vadd.f32 %v1557, %v1559
        %v2044 = vadd.f32 %v2043, %v1561
        %v2045 = vadd.f32 %v2044, %v1563
        %2046 = vadd.xlane.f32.xlu0 %v2045
        %v2047 = vpop.xlane.xlu0 %2046
        %v2048 = vadd.f32 %v1565, %v1567
        %v2049 = vadd.f32 %v2048, %v1569
        %v2050 = vadd.f32 %v2049, %v1571
        %2051 = vadd.xlane.f32.xlu0 %v2050
        %v2052 = vpop.xlane.xlu0 %2051
        %v2053 = vadd.f32 %v1573, %v1575
        %v2054 = vadd.f32 %v2053, %v1577
        %v2055 = vadd.f32 %v2054, %v1579
        %2056 = vadd.xlane.f32.xlu0 %v2055
        %v2057 = vpop.xlane.xlu0 %2056
        %v2058 = vadd.f32 %v1581, %v1583
        %v2059 = vadd.f32 %v2058, %v1585
        %v2060 = vadd.f32 %v2059, %v1587
        %2061 = vadd.xlane.f32.xlu0 %v2060
        %v2062 = vpop.xlane.xlu0 %2061
        %v2063 = vadd.f32 %v1589, %v1591
        %v2064 = vadd.f32 %v2063, %v1593
        %v2065 = vadd.f32 %v2064, %v1595
        %2066 = vadd.xlane.f32.xlu0 %v2065
        %v2067 = vpop.xlane.xlu0 %2066
        %v2068 = vmax.f32 %v1912, 1e-30
        %v2069 = vmax.f32 %v1917, 1e-30
        %v2070 = vmax.f32 %v1922, 1e-30
        %v2071 = vmax.f32 %v1927, 1e-30
        %v2072 = vmax.f32 %v1932, 1e-30
        %v2073 = vmax.f32 %v1937, 1e-30
        %v2074 = vmax.f32 %v1942, 1e-30
        %v2075 = vmax.f32 %v1947, 1e-30
        %v2076 = vmax.f32 %v1952, 1e-30
        %v2077 = vmax.f32 %v1957, 1e-30
        %v2078 = vmax.f32 %v1962, 1e-30
        %v2079 = vmax.f32 %v1967, 1e-30
        %v2080 = vmax.f32 %v1972, 1e-30
        %v2081 = vmax.f32 %v1977, 1e-30
        %v2082 = vmax.f32 %v1982, 1e-30
        %v2083 = vmax.f32 %v1987, 1e-30
        %v2084 = vmax.f32 %v1992, 1e-30
        %v2085 = vmax.f32 %v1997, 1e-30
        %v2086 = vmax.f32 %v2002, 1e-30
        %v2087 = vmax.f32 %v2007, 1e-30
        %v2088 = vmax.f32 %v2012, 1e-30
        %v2089 = vmax.f32 %v2017, 1e-30
        %v2090 = vmax.f32 %v2022, 1e-30
        %v2091 = vmax.f32 %v2027, 1e-30
        %v2092 = vmax.f32 %v2032, 1e-30
        %v2093 = vmax.f32 %v2037, 1e-30
        %v2094 = vmax.f32 %v2042, 1e-30
        %v2095 = vmax.f32 %v2047, 1e-30
        %v2096 = vmax.f32 %v2052, 1e-30
        %v2097 = vmax.f32 %v2057, 1e-30
        %v2098 = vmax.f32 %v2062, 1e-30
        %v2099 = vmax.f32 %v2067, 1e-30
        %v2100 = vlog2.pop %v2068
        %v2101 = vmul.f32 %v2100, 0.6931472
        %v2102 = vlog2.pop %v2069
        %v2103 = vmul.f32 %v2102, 0.6931472
        %v2104 = vlog2.pop %v2070
        %v2105 = vmul.f32 %v2104, 0.6931472
        %v2106 = vlog2.pop %v2071
        %v2107 = vmul.f32 %v2106, 0.6931472
        %v2108 = vlog2.pop %v2072
        %v2109 = vmul.f32 %v2108, 0.6931472
        %v2110 = vlog2.pop %v2073
        %v2111 = vmul.f32 %v2110, 0.6931472
        %v2112 = vlog2.pop %v2074
        %v2113 = vmul.f32 %v2112, 0.6931472
        %v2114 = vlog2.pop %v2075
        %v2115 = vmul.f32 %v2114, 0.6931472
        %v2116 = vlog2.pop %v2076
        %v2117 = vmul.f32 %v2116, 0.6931472
        %v2118 = vlog2.pop %v2077
        %v2119 = vmul.f32 %v2118, 0.6931472
        %v2120 = vlog2.pop %v2078
        %v2121 = vmul.f32 %v2120, 0.6931472
        %v2122 = vlog2.pop %v2079
        %v2123 = vmul.f32 %v2122, 0.6931472
        %v2124 = vlog2.pop %v2080
        %v2125 = vmul.f32 %v2124, 0.6931472
        %v2126 = vlog2.pop %v2081
        %v2127 = vmul.f32 %v2126, 0.6931472
        %v2128 = vlog2.pop %v2082
        %v2129 = vmul.f32 %v2128, 0.6931472
        %v2130 = vlog2.pop %v2083
        %v2131 = vmul.f32 %v2130, 0.6931472
        %v2132 = vlog2.pop %v2084
        %v2133 = vmul.f32 %v2132, 0.6931472
        %v2134 = vlog2.pop %v2085
        %v2135 = vmul.f32 %v2134, 0.6931472
        %v2136 = vlog2.pop %v2086
        %v2137 = vmul.f32 %v2136, 0.6931472
        %v2138 = vlog2.pop %v2087
        %v2139 = vmul.f32 %v2138, 0.6931472
        %v2140 = vlog2.pop %v2088
        %v2141 = vmul.f32 %v2140, 0.6931472
        %v2142 = vlog2.pop %v2089
        %v2143 = vmul.f32 %v2142, 0.6931472
        %v2144 = vlog2.pop %v2090
        %v2145 = vmul.f32 %v2144, 0.6931472
        %v2146 = vlog2.pop %v2091
        %v2147 = vmul.f32 %v2146, 0.6931472
        %v2148 = vlog2.pop %v2092
        %v2149 = vmul.f32 %v2148, 0.6931472
        %v2150 = vlog2.pop %v2093
        %v2151 = vmul.f32 %v2150, 0.6931472
        %v2152 = vlog2.pop %v2094
        %v2153 = vmul.f32 %v2152, 0.6931472
        %v2154 = vlog2.pop %v2095
        %v2155 = vmul.f32 %v2154, 0.6931472
        %v2156 = vlog2.pop %v2096
        %v2157 = vmul.f32 %v2156, 0.6931472
        %v2158 = vlog2.pop %v2097
        %v2159 = vmul.f32 %v2158, 0.6931472
        %v2160 = vlog2.pop %v2098
        %v2161 = vmul.f32 %v2160, 0.6931472
        %v2162 = vlog2.pop %v2099
        %v2163 = vmul.f32 %v2162, 0.6931472
        %v2164 = vadd.f32 %v2101, 20.0
        %v2165 = vadd.f32 %v2103, 20.0
        %v2166 = vadd.f32 %v2105, 20.0
        %v2167 = vadd.f32 %v2107, 20.0
        %v2168 = vadd.f32 %v2109, 20.0
        %v2169 = vadd.f32 %v2111, 20.0
        %v2170 = vadd.f32 %v2113, 20.0
        %v2171 = vadd.f32 %v2115, 20.0
        %v2172 = vadd.f32 %v2117, 20.0
        %v2173 = vadd.f32 %v2119, 20.0
        %v2174 = vadd.f32 %v2121, 20.0
        %v2175 = vadd.f32 %v2123, 20.0
        %v2176 = vadd.f32 %v2125, 20.0
        %v2177 = vadd.f32 %v2127, 20.0
        %v2178 = vadd.f32 %v2129, 20.0
        %v2179 = vadd.f32 %v2131, 20.0
        %v2180 = vadd.f32 %v2133, 20.0
        %v2181 = vadd.f32 %v2135, 20.0
        %v2182 = vadd.f32 %v2137, 20.0
        %v2183 = vadd.f32 %v2139, 20.0
        %v2184 = vadd.f32 %v2141, 20.0
        %v2185 = vadd.f32 %v2143, 20.0
        %v2186 = vadd.f32 %v2145, 20.0
        %v2187 = vadd.f32 %v2147, 20.0
        %v2188 = vadd.f32 %v2149, 20.0
        %v2189 = vadd.f32 %v2151, 20.0
        %v2190 = vadd.f32 %v2153, 20.0
        %v2191 = vadd.f32 %v2155, 20.0
        %v2192 = vadd.f32 %v2157, 20.0
        %v2193 = vadd.f32 %v2159, 20.0
        %v2194 = vadd.f32 %v2161, 20.0
        %v2195 = vadd.f32 %v2163, 20.0
        %v2196 = vld [vmem:[#allocation3] sm:$0xf]
        %v2197 = vmul.f32 %v1012, 2.0
        %v2198 = vmul.f32 %v1013, 2.0
        %v2199 = vmul.f32 %v1014, 2.0
        %v2200 = vmul.f32 %v1015, 2.0
        %v2201 = vmul.f32 %v1016, 2.0
        %v2202 = vmul.f32 %v1017, 2.0
        %v2203 = vmul.f32 %v1018, 2.0
        %v2204 = vmul.f32 %v1019, 2.0
        %v2205 = vmul.f32 %v1020, 2.0
        %v2206 = vmul.f32 %v1021, 2.0
        %v2207 = vmul.f32 %v1022, 2.0
        %v2208 = vmul.f32 %v1023, 2.0
        %v2209 = vmul.f32 %v1024, 2.0
        %v2210 = vmul.f32 %v1025, 2.0
        %v2211 = vmul.f32 %v1026, 2.0
        %v2212 = vmul.f32 %v1027, 2.0
        %v2213 = vmul.f32 %v1028, 2.0
        %v2214 = vmul.f32 %v1029, 2.0
        %v2215 = vmul.f32 %v1030, 2.0
        %v2216 = vmul.f32 %v1031, 2.0
        %v2217 = vmul.f32 %v1032, 2.0
        %v2218 = vmul.f32 %v1033, 2.0
        %v2219 = vmul.f32 %v1034, 2.0
        %v2220 = vmul.f32 %v1035, 2.0
        %v2221 = vmul.f32 %v1036, 2.0
        %v2222 = vmul.f32 %v1037, 2.0
        %v2223 = vmul.f32 %v1038, 2.0
        %v2224 = vmul.f32 %v1039, 2.0
        %v2225 = vmul.f32 %v1040, 2.0
        %v2226 = vmul.f32 %v1041, 2.0
        %v2227 = vmul.f32 %v1042, 2.0
        %v2228 = vmul.f32 %v1043, 2.0
        %v2229 = vmul.f32 %v1044, 2.0
        %v2230 = vmul.f32 %v1045, 2.0
        %v2231 = vmul.f32 %v1046, 2.0
        %v2232 = vmul.f32 %v1047, 2.0
        %v2233 = vmul.f32 %v1048, 2.0
        %v2234 = vmul.f32 %v1049, 2.0
        %v2235 = vmul.f32 %v1050, 2.0
        %v2236 = vmul.f32 %v1051, 2.0
        %v2237 = vmul.f32 %v1052, 2.0
        %v2238 = vmul.f32 %v1053, 2.0
        %v2239 = vmul.f32 %v1054, 2.0
        %v2240 = vmul.f32 %v1055, 2.0
        %v2241 = vmul.f32 %v1056, 2.0
        %v2242 = vmul.f32 %v1057, 2.0
        %v2243 = vmul.f32 %v1058, 2.0
        %v2244 = vmul.f32 %v1059, 2.0
        %v2245 = vmul.f32 %v1060, 2.0
        %v2246 = vmul.f32 %v1061, 2.0
        %v2247 = vmul.f32 %v1062, 2.0
        %v2248 = vmul.f32 %v1063, 2.0
        %v2249 = vmul.f32 %v1064, 2.0
        %v2250 = vmul.f32 %v1065, 2.0
        %v2251 = vmul.f32 %v1066, 2.0
        %v2252 = vmul.f32 %v1067, 2.0
        %v2253 = vmul.f32 %v1068, 2.0
        %v2254 = vmul.f32 %v1069, 2.0
        %v2255 = vmul.f32 %v1070, 2.0
        %v2256 = vmul.f32 %v1071, 2.0
        %v2257 = vmul.f32 %v1072, 2.0
        %v2258 = vmul.f32 %v1073, 2.0
        %v2259 = vmul.f32 %v1074, 2.0
        %v2260 = vmul.f32 %v1075, 2.0
        %v2261 = vmul.f32 %v1076, 2.0
        %v2262 = vmul.f32 %v1077, 2.0
        %v2263 = vmul.f32 %v1078, 2.0
        %v2264 = vmul.f32 %v1079, 2.0
        %v2265 = vmul.f32 %v1080, 2.0
        %v2266 = vmul.f32 %v1081, 2.0
        %v2267 = vmul.f32 %v1082, 2.0
        %v2268 = vmul.f32 %v1083, 2.0
        %v2269 = vmul.f32 %v1084, 2.0
        %v2270 = vmul.f32 %v1085, 2.0
        %v2271 = vmul.f32 %v1086, 2.0
        %v2272 = vmul.f32 %v1087, 2.0
        %v2273 = vmul.f32 %v1088, 2.0
        %v2274 = vmul.f32 %v1089, 2.0
        %v2275 = vmul.f32 %v1090, 2.0
        %v2276 = vmul.f32 %v1091, 2.0
        %v2277 = vmul.f32 %v1092, 2.0
        %v2278 = vmul.f32 %v1093, 2.0
        %v2279 = vmul.f32 %v1094, 2.0
        %v2280 = vmul.f32 %v1095, 2.0
        %v2281 = vmul.f32 %v1096, 2.0
        %v2282 = vmul.f32 %v1097, 2.0
        %v2283 = vmul.f32 %v1098, 2.0
        %v2284 = vmul.f32 %v1099, 2.0
        %v2285 = vmul.f32 %v1100, 2.0
        %v2286 = vmul.f32 %v1101, 2.0
        %v2287 = vmul.f32 %v1102, 2.0
        %v2288 = vmul.f32 %v1103, 2.0
        %v2289 = vmul.f32 %v1104, 2.0
        %v2290 = vmul.f32 %v1105, 2.0
        %v2291 = vmul.f32 %v1106, 2.0
        %v2292 = vmul.f32 %v1107, 2.0
        %v2293 = vmul.f32 %v1108, 2.0
        %v2294 = vmul.f32 %v1109, 2.0
        %v2295 = vmul.f32 %v1110, 2.0
        %v2296 = vmul.f32 %v1111, 2.0
        %v2297 = vmul.f32 %v1112, 2.0
        %v2298 = vmul.f32 %v1113, 2.0
        %v2299 = vmul.f32 %v1114, 2.0
        %v2300 = vmul.f32 %v1115, 2.0
        %v2301 = vmul.f32 %v1116, 2.0
        %v2302 = vmul.f32 %v1117, 2.0
        %v2303 = vmul.f32 %v1118, 2.0
        %v2304 = vmul.f32 %v1119, 2.0
        %v2305 = vmul.f32 %v1120, 2.0
        %v2306 = vmul.f32 %v1121, 2.0
        %v2307 = vmul.f32 %v1122, 2.0
        %v2308 = vmul.f32 %v1123, 2.0
        %v2309 = vmul.f32 %v1124, 2.0
        %v2310 = vmul.f32 %v1125, 2.0
        %v2311 = vmul.f32 %v1126, 2.0
        %v2312 = vmul.f32 %v1127, 2.0
        %v2313 = vmul.f32 %v1128, 2.0
        %v2314 = vmul.f32 %v1129, 2.0
        %v2315 = vmul.f32 %v1130, 2.0
        %v2316 = vmul.f32 %v1131, 2.0
        %v2317 = vmul.f32 %v1132, 2.0
        %v2318 = vmul.f32 %v1133, 2.0
        %v2319 = vmul.f32 %v1134, 2.0
        %v2320 = vmul.f32 %v1135, 2.0
        %v2321 = vmul.f32 %v1136, 2.0
        %v2322 = vmul.f32 %v1137, 2.0
        %v2323 = vmul.f32 %v1138, 2.0
        %v2324 = vmul.f32 %v1139, 2.0
        %v2325 = vsub.f32 %v2197, %v2164
        %v2326 = vsub.f32 %v2198, %v2164
        %v2327 = vsub.f32 %v2199, %v2164
        %v2328 = vsub.f32 %v2200, %v2164
        %v2329 = vsub.f32 %v2201, %v2165
        %v2330 = vsub.f32 %v2202, %v2165
        %v2331 = vsub.f32 %v2203, %v2165
        %v2332 = vsub.f32 %v2204, %v2165
        %v2333 = vsub.f32 %v2205, %v2166
        %v2334 = vsub.f32 %v2206, %v2166
        %v2335 = vsub.f32 %v2207, %v2166
        %v2336 = vsub.f32 %v2208, %v2166
        %v2337 = vsub.f32 %v2209, %v2167
        %v2338 = vsub.f32 %v2210, %v2167
        %v2339 = vsub.f32 %v2211, %v2167
        %v2340 = vsub.f32 %v2212, %v2167
        %v2341 = vsub.f32 %v2213, %v2168
        %v2342 = vsub.f32 %v2214, %v2168
        %v2343 = vsub.f32 %v2215, %v2168
        %v2344 = vsub.f32 %v2216, %v2168
        %v2345 = vsub.f32 %v2217, %v2169
        %v2346 = vsub.f32 %v2218, %v2169
        %v2347 = vsub.f32 %v2219, %v2169
        %v2348 = vsub.f32 %v2220, %v2169
        %v2349 = vsub.f32 %v2221, %v2170
        %v2350 = vsub.f32 %v2222, %v2170
        %v2351 = vsub.f32 %v2223, %v2170
        %v2352 = vsub.f32 %v2224, %v2170
        %v2353 = vsub.f32 %v2225, %v2171
        %v2354 = vsub.f32 %v2226, %v2171
        %v2355 = vsub.f32 %v2227, %v2171
        %v2356 = vsub.f32 %v2228, %v2171
        %v2357 = vsub.f32 %v2229, %v2172
        %v2358 = vsub.f32 %v2230, %v2172
        %v2359 = vsub.f32 %v2231, %v2172
        %v2360 = vsub.f32 %v2232, %v2172
        %v2361 = vsub.f32 %v2233, %v2173
        %v2362 = vsub.f32 %v2234, %v2173
        %v2363 = vsub.f32 %v2235, %v2173
        %v2364 = vsub.f32 %v2236, %v2173
        %v2365 = vsub.f32 %v2237, %v2174
        %v2366 = vsub.f32 %v2238, %v2174
        %v2367 = vsub.f32 %v2239, %v2174
        %v2368 = vsub.f32 %v2240, %v2174
        %v2369 = vsub.f32 %v2241, %v2175
        %v2370 = vsub.f32 %v2242, %v2175
        %v2371 = vsub.f32 %v2243, %v2175
        %v2372 = vsub.f32 %v2244, %v2175
        %v2373 = vsub.f32 %v2245, %v2176
        %v2374 = vsub.f32 %v2246, %v2176
        %v2375 = vsub.f32 %v2247, %v2176
        %v2376 = vsub.f32 %v2248, %v2176
        %v2377 = vsub.f32 %v2249, %v2177
        %v2378 = vsub.f32 %v2250, %v2177
        %v2379 = vsub.f32 %v2251, %v2177
        %v2380 = vsub.f32 %v2252, %v2177
        %v2381 = vsub.f32 %v2253, %v2178
        %v2382 = vsub.f32 %v2254, %v2178
        %v2383 = vsub.f32 %v2255, %v2178
        %v2384 = vsub.f32 %v2256, %v2178
        %v2385 = vsub.f32 %v2257, %v2179
        %v2386 = vsub.f32 %v2258, %v2179
        %v2387 = vsub.f32 %v2259, %v2179
        %v2388 = vsub.f32 %v2260, %v2179
        %v2389 = vsub.f32 %v2261, %v2180
        %v2390 = vsub.f32 %v2262, %v2180
        %v2391 = vsub.f32 %v2263, %v2180
        %v2392 = vsub.f32 %v2264, %v2180
        %v2393 = vsub.f32 %v2265, %v2181
        %v2394 = vsub.f32 %v2266, %v2181
        %v2395 = vsub.f32 %v2267, %v2181
        %v2396 = vsub.f32 %v2268, %v2181
        %v2397 = vsub.f32 %v2269, %v2182
        %v2398 = vsub.f32 %v2270, %v2182
        %v2399 = vsub.f32 %v2271, %v2182
        %v2400 = vsub.f32 %v2272, %v2182
        %v2401 = vsub.f32 %v2273, %v2183
        %v2402 = vsub.f32 %v2274, %v2183
        %v2403 = vsub.f32 %v2275, %v2183
        %v2404 = vsub.f32 %v2276, %v2183
        %v2405 = vsub.f32 %v2277, %v2184
        %v2406 = vsub.f32 %v2278, %v2184
        %v2407 = vsub.f32 %v2279, %v2184
        %v2408 = vsub.f32 %v2280, %v2184
        %v2409 = vsub.f32 %v2281, %v2185
        %v2410 = vsub.f32 %v2282, %v2185
        %v2411 = vsub.f32 %v2283, %v2185
        %v2412 = vsub.f32 %v2284, %v2185
        %v2413 = vsub.f32 %v2285, %v2186
        %v2414 = vsub.f32 %v2286, %v2186
        %v2415 = vsub.f32 %v2287, %v2186
        %v2416 = vsub.f32 %v2288, %v2186
        %v2417 = vsub.f32 %v2289, %v2187
        %v2418 = vsub.f32 %v2290, %v2187
        %v2419 = vsub.f32 %v2291, %v2187
        %v2420 = vsub.f32 %v2292, %v2187
        %v2421 = vsub.f32 %v2293, %v2188
        %v2422 = vsub.f32 %v2294, %v2188
        %v2423 = vsub.f32 %v2295, %v2188
        %v2424 = vsub.f32 %v2296, %v2188
        %v2425 = vsub.f32 %v2297, %v2189
        %v2426 = vsub.f32 %v2298, %v2189
        %v2427 = vsub.f32 %v2299, %v2189
        %v2428 = vsub.f32 %v2300, %v2189
        %v2429 = vsub.f32 %v2301, %v2190
        %v2430 = vsub.f32 %v2302, %v2190
        %v2431 = vsub.f32 %v2303, %v2190
        %v2432 = vsub.f32 %v2304, %v2190
        %v2433 = vsub.f32 %v2305, %v2191
        %v2434 = vsub.f32 %v2306, %v2191
        %v2435 = vsub.f32 %v2307, %v2191
        %v2436 = vsub.f32 %v2308, %v2191
        %v2437 = vsub.f32 %v2309, %v2192
        %v2438 = vsub.f32 %v2310, %v2192
        %v2439 = vsub.f32 %v2311, %v2192
        %v2440 = vsub.f32 %v2312, %v2192
        %v2441 = vsub.f32 %v2313, %v2193
        %v2442 = vsub.f32 %v2314, %v2193
        %v2443 = vsub.f32 %v2315, %v2193
        %v2444 = vsub.f32 %v2316, %v2193
        %v2445 = vsub.f32 %v2317, %v2194
        %v2446 = vsub.f32 %v2318, %v2194
        %v2447 = vsub.f32 %v2319, %v2194
        %v2448 = vsub.f32 %v2320, %v2194
        %v2449 = vsub.f32 %v2321, %v2195
        %v2450 = vsub.f32 %v2322, %v2195
        %v2451 = vsub.f32 %v2323, %v2195
        %v2452 = vsub.f32 %v2324, %v2195
        %v2453 = vsel %vm1596, %v2325, 0.0
        %v2454 = vsel %vm1597, %v2326, 0.0
        %v2455 = vsel %vm1598, %v2327, 0.0
        %v2456 = vsel %vm1599, %v2328, 0.0
        %v2457 = vsel %vm1600, %v2329, 0.0
        %v2458 = vsel %vm1601, %v2330, 0.0
        %v2459 = vsel %vm1602, %v2331, 0.0
        %v2460 = vsel %vm1603, %v2332, 0.0
        %v2461 = vsel %vm1604, %v2333, 0.0
        %v2462 = vsel %vm1605, %v2334, 0.0
        %v2463 = vsel %vm1606, %v2335, 0.0
        %v2464 = vsel %vm1607, %v2336, 0.0
        %v2465 = vsel %vm1608, %v2337, 0.0
        %v2466 = vsel %vm1609, %v2338, 0.0
        %v2467 = vsel %vm1610, %v2339, 0.0
        %v2468 = vsel %vm1611, %v2340, 0.0
        %v2469 = vsel %vm1612, %v2341, 0.0
        %v2470 = vsel %vm1613, %v2342, 0.0
        %v2471 = vsel %vm1614, %v2343, 0.0
        %v2472 = vsel %vm1615, %v2344, 0.0
        %v2473 = vsel %vm1616, %v2345, 0.0
        %v2474 = vsel %vm1617, %v2346, 0.0
        %v2475 = vsel %vm1618, %v2347, 0.0
        %v2476 = vsel %vm1619, %v2348, 0.0
        %v2477 = vsel %vm1620, %v2349, 0.0
        %v2478 = vsel %vm1621, %v2350, 0.0
        %v2479 = vsel %vm1622, %v2351, 0.0
        %v2480 = vsel %vm1623, %v2352, 0.0
        %v2481 = vsel %vm1624, %v2353, 0.0
        %v2482 = vsel %vm1625, %v2354, 0.0
        %v2483 = vsel %vm1626, %v2355, 0.0
        %v2484 = vsel %vm1627, %v2356, 0.0
        %v2485 = vsel %vm1628, %v2357, 0.0
        %v2486 = vsel %vm1629, %v2358, 0.0
        %v2487 = vsel %vm1630, %v2359, 0.0
        %v2488 = vsel %vm1631, %v2360, 0.0
        %v2489 = vsel %vm1632, %v2361, 0.0
        %v2490 = vsel %vm1633, %v2362, 0.0
        %v2491 = vsel %vm1634, %v2363, 0.0
        %v2492 = vsel %vm1635, %v2364, 0.0
        %v2493 = vsel %vm1636, %v2365, 0.0
        %v2494 = vsel %vm1637, %v2366, 0.0
        %v2495 = vsel %vm1638, %v2367, 0.0
        %v2496 = vsel %vm1639, %v2368, 0.0
        %v2497 = vsel %vm1640, %v2369, 0.0
        %v2498 = vsel %vm1641, %v2370, 0.0
        %v2499 = vsel %vm1642, %v2371, 0.0
        %v2500 = vsel %vm1643, %v2372, 0.0
        %v2501 = vsel %vm1644, %v2373, 0.0
        %v2502 = vsel %vm1645, %v2374, 0.0
        %v2503 = vsel %vm1646, %v2375, 0.0
        %v2504 = vsel %vm1647, %v2376, 0.0
        %v2505 = vsel %vm1648, %v2377, 0.0
        %v2506 = vsel %vm1649, %v2378, 0.0
        %v2507 = vsel %vm1650, %v2379, 0.0
        %v2508 = vsel %vm1651, %v2380, 0.0
        %v2509 = vsel %vm1652, %v2381, 0.0
        %v2510 = vsel %vm1653, %v2382, 0.0
        %v2511 = vsel %vm1654, %v2383, 0.0
        %v2512 = vsel %vm1655, %v2384, 0.0
        %v2513 = vsel %vm1656, %v2385, 0.0
        %v2514 = vsel %vm1657, %v2386, 0.0
        %v2515 = vsel %vm1658, %v2387, 0.0
        %v2516 = vsel %vm1659, %v2388, 0.0
        %v2517 = vsel %vm1660, %v2389, 0.0
        %v2518 = vsel %vm1661, %v2390, 0.0
        %v2519 = vsel %vm1662, %v2391, 0.0
        %v2520 = vsel %vm1663, %v2392, 0.0
        %v2521 = vsel %vm1664, %v2393, 0.0
        %v2522 = vsel %vm1665, %v2394, 0.0
        %v2523 = vsel %vm1666, %v2395, 0.0
        %v2524 = vsel %vm1667, %v2396, 0.0
        %v2525 = vsel %vm1668, %v2397, 0.0
        %v2526 = vsel %vm1669, %v2398, 0.0
        %v2527 = vsel %vm1670, %v2399, 0.0
        %v2528 = vsel %vm1671, %v2400, 0.0
        %v2529 = vsel %vm1672, %v2401, 0.0
        %v2530 = vsel %vm1673, %v2402, 0.0
        %v2531 = vsel %vm1674, %v2403, 0.0
        %v2532 = vsel %vm1675, %v2404, 0.0
        %v2533 = vsel %vm1676, %v2405, 0.0
        %v2534 = vsel %vm1677, %v2406, 0.0
        %v2535 = vsel %vm1678, %v2407, 0.0
        %v2536 = vsel %vm1679, %v2408, 0.0
        %v2537 = vsel %vm1680, %v2409, 0.0
        %v2538 = vsel %vm1681, %v2410, 0.0
        %v2539 = vsel %vm1682, %v2411, 0.0
        %v2540 = vsel %vm1683, %v2412, 0.0
        %v2541 = vsel %vm1684, %v2413, 0.0
        %v2542 = vsel %vm1685, %v2414, 0.0
        %v2543 = vsel %vm1686, %v2415, 0.0
        %v2544 = vsel %vm1687, %v2416, 0.0
        %v2545 = vsel %vm1688, %v2417, 0.0
        %v2546 = vsel %vm1689, %v2418, 0.0
        %v2547 = vsel %vm1690, %v2419, 0.0
        %v2548 = vsel %vm1691, %v2420, 0.0
        %v2549 = vsel %vm1692, %v2421, 0.0
        %v2550 = vsel %vm1693, %v2422, 0.0
        %v2551 = vsel %vm1694, %v2423, 0.0
        %v2552 = vsel %vm1695, %v2424, 0.0
        %v2553 = vsel %vm1696, %v2425, 0.0
        %v2554 = vsel %vm1697, %v2426, 0.0
        %v2555 = vsel %vm1698, %v2427, 0.0
        %v2556 = vsel %vm1699, %v2428, 0.0
        %v2557 = vsel %vm1700, %v2429, 0.0
        %v2558 = vsel %vm1701, %v2430, 0.0
        %v2559 = vsel %vm1702, %v2431, 0.0
        %v2560 = vsel %vm1703, %v2432, 0.0
        %v2561 = vsel %vm1704, %v2433, 0.0
        %v2562 = vsel %vm1705, %v2434, 0.0
        %v2563 = vsel %vm1706, %v2435, 0.0
        %v2564 = vsel %vm1707, %v2436, 0.0
        %v2565 = vsel %vm1708, %v2437, 0.0
        %v2566 = vsel %vm1709, %v2438, 0.0
        %v2567 = vsel %vm1710, %v2439, 0.0
        %v2568 = vsel %vm1711, %v2440, 0.0
        %v2569 = vsel %vm1712, %v2441, 0.0
        %v2570 = vsel %vm1713, %v2442, 0.0
        %v2571 = vsel %vm1714, %v2443, 0.0
        %v2572 = vsel %vm1715, %v2444, 0.0
        %v2573 = vsel %vm1716, %v2445, 0.0
        %v2574 = vsel %vm1717, %v2446, 0.0
        %v2575 = vsel %vm1718, %v2447, 0.0
        %v2576 = vsel %vm1719, %v2448, 0.0
        %v2577 = vsel %vm1720, %v2449, 0.0
        %v2578 = vsel %vm1721, %v2450, 0.0
        %v2579 = vsel %vm1722, %v2451, 0.0
        %v2580 = vsel %vm1723, %v2452, 0.0
        %v2581 = vadd.f32 %v2453, %v2457
        %v2582 = vadd.f32 %v2581, %v2461
        %v2583 = vadd.f32 %v2582, %v2465
        %v2584 = vadd.f32 %v2583, %v2469
        %v2585 = vadd.f32 %v2584, %v2473
        %v2586 = vadd.f32 %v2585, %v2477
        %v2587 = vadd.f32 %v2586, %v2481
        %v2588 = vadd.f32 %v2587, %v2485
        %v2589 = vadd.f32 %v2588, %v2489
        %v2590 = vadd.f32 %v2589, %v2493
        %v2591 = vadd.f32 %v2590, %v2497
        %v2592 = vadd.f32 %v2591, %v2501
        %v2593 = vadd.f32 %v2592, %v2505
        %v2594 = vadd.f32 %v2593, %v2509
        %v2595 = vadd.f32 %v2594, %v2513
        %v2596 = vadd.f32 %v2595, %v2517
        %v2597 = vadd.f32 %v2596, %v2521
        %v2598 = vadd.f32 %v2597, %v2525
        %v2599 = vadd.f32 %v2598, %v2529
        %v2600 = vadd.f32 %v2599, %v2533
        %v2601 = vadd.f32 %v2600, %v2537
        %v2602 = vadd.f32 %v2601, %v2541
        %v2603 = vadd.f32 %v2602, %v2545
        %v2604 = vadd.f32 %v2603, %v2549
        %v2605 = vadd.f32 %v2604, %v2553
        %v2606 = vadd.f32 %v2605, %v2557
        %v2607 = vadd.f32 %v2606, %v2561
        %v2608 = vadd.f32 %v2607, %v2565
        %v2609 = vadd.f32 %v2608, %v2569
        %v2610 = vadd.f32 %v2609, %v2573
        %v2611 = vadd.f32 %v2610, %v2577
        %v2612 = vrot.slane %v2611, 4
        %v2613 = vadd.f32 %v2611, %v2612
        %v2614 = vrot.slane %v2613, 2
        %v2615 = vadd.f32 %v2613, %v2614
        %v2616 = vrot.slane %v2615, 1
        %v2617 = vadd.f32 %v2615, %v2616
        %v2618 = vadd.f32 %v2454, %v2458
        %v2619 = vadd.f32 %v2618, %v2462
        %v2620 = vadd.f32 %v2619, %v2466
        %v2621 = vadd.f32 %v2620, %v2470
        %v2622 = vadd.f32 %v2621, %v2474
        %v2623 = vadd.f32 %v2622, %v2478
        %v2624 = vadd.f32 %v2623, %v2482
        %v2625 = vadd.f32 %v2624, %v2486
        %v2626 = vadd.f32 %v2625, %v2490
        %v2627 = vadd.f32 %v2626, %v2494
        %v2628 = vadd.f32 %v2627, %v2498
        %v2629 = vadd.f32 %v2628, %v2502
        %v2630 = vadd.f32 %v2629, %v2506
        %v2631 = vadd.f32 %v2630, %v2510
        %v2632 = vadd.f32 %v2631, %v2514
        %v2633 = vadd.f32 %v2632, %v2518
        %v2634 = vadd.f32 %v2633, %v2522
        %v2635 = vadd.f32 %v2634, %v2526
        %v2636 = vadd.f32 %v2635, %v2530
        %v2637 = vadd.f32 %v2636, %v2534
        %v2638 = vadd.f32 %v2637, %v2538
        %v2639 = vadd.f32 %v2638, %v2542
        %v2640 = vadd.f32 %v2639, %v2546
        %v2641 = vadd.f32 %v2640, %v2550
        %v2642 = vadd.f32 %v2641, %v2554
        %v2643 = vadd.f32 %v2642, %v2558
        %v2644 = vadd.f32 %v2643, %v2562
        %v2645 = vadd.f32 %v2644, %v2566
        %v2646 = vadd.f32 %v2645, %v2570
        %v2647 = vadd.f32 %v2646, %v2574
        %v2648 = vadd.f32 %v2647, %v2578
        %v2649 = vrot.slane %v2648, 4
        %v2650 = vadd.f32 %v2648, %v2649
        %v2651 = vrot.slane %v2650, 2
        %v2652 = vadd.f32 %v2650, %v2651
        %v2653 = vrot.slane %v2652, 1
        %v2654 = vadd.f32 %v2652, %v2653
        %v2655 = vadd.f32 %v2455, %v2459
        %v2656 = vadd.f32 %v2655, %v2463
        %v2657 = vadd.f32 %v2656, %v2467
        %v2658 = vadd.f32 %v2657, %v2471
        %v2659 = vadd.f32 %v2658, %v2475
        %v2660 = vadd.f32 %v2659, %v2479
        %v2661 = vadd.f32 %v2660, %v2483
        %v2662 = vadd.f32 %v2661, %v2487
        %v2663 = vadd.f32 %v2662, %v2491
        %v2664 = vadd.f32 %v2663, %v2495
        %v2665 = vadd.f32 %v2664, %v2499
        %v2666 = vadd.f32 %v2665, %v2503
        %v2667 = vadd.f32 %v2666, %v2507
        %v2668 = vadd.f32 %v2667, %v2511
        %v2669 = vadd.f32 %v2668, %v2515
        %v2670 = vadd.f32 %v2669, %v2519
        %v2671 = vadd.f32 %v2670, %v2523
        %v2672 = vadd.f32 %v2671, %v2527
        %v2673 = vadd.f32 %v2672, %v2531
        %v2674 = vadd.f32 %v2673, %v2535
        %v2675 = vadd.f32 %v2674, %v2539
        %v2676 = vadd.f32 %v2675, %v2543
        %v2677 = vadd.f32 %v2676, %v2547
        %v2678 = vadd.f32 %v2677, %v2551
        %v2679 = vadd.f32 %v2678, %v2555
        %v2680 = vadd.f32 %v2679, %v2559
        %v2681 = vadd.f32 %v2680, %v2563
        %v2682 = vadd.f32 %v2681, %v2567
        %v2683 = vadd.f32 %v2682, %v2571
        %v2684 = vadd.f32 %v2683, %v2575
        %v2685 = vadd.f32 %v2684, %v2579
        %v2686 = vrot.slane %v2685, 4
        %v2687 = vadd.f32 %v2685, %v2686
        %v2688 = vrot.slane %v2687, 2
        %v2689 = vadd.f32 %v2687, %v2688
        %v2690 = vrot.slane %v2689, 1
        %v2691 = vadd.f32 %v2689, %v2690
        %v2692 = vadd.f32 %v2456, %v2460
        %v2693 = vadd.f32 %v2692, %v2464
        %v2694 = vadd.f32 %v2693, %v2468
        %v2695 = vadd.f32 %v2694, %v2472
        %v2696 = vadd.f32 %v2695, %v2476
        %v2697 = vadd.f32 %v2696, %v2480
        %v2698 = vadd.f32 %v2697, %v2484
        %v2699 = vadd.f32 %v2698, %v2488
        %v2700 = vadd.f32 %v2699, %v2492
        %v2701 = vadd.f32 %v2700, %v2496
        %v2702 = vadd.f32 %v2701, %v2500
        %v2703 = vadd.f32 %v2702, %v2504
        %v2704 = vadd.f32 %v2703, %v2508
        %v2705 = vadd.f32 %v2704, %v2512
        %v2706 = vadd.f32 %v2705, %v2516
        %v2707 = vadd.f32 %v2706, %v2520
        %v2708 = vadd.f32 %v2707, %v2524
        %v2709 = vadd.f32 %v2708, %v2528
        %v2710 = vadd.f32 %v2709, %v2532
        %v2711 = vadd.f32 %v2710, %v2536
        %v2712 = vadd.f32 %v2711, %v2540
        %v2713 = vadd.f32 %v2712, %v2544
        %v2714 = vadd.f32 %v2713, %v2548
        %v2715 = vadd.f32 %v2714, %v2552
        %v2716 = vadd.f32 %v2715, %v2556
        %v2717 = vadd.f32 %v2716, %v2560
        %v2718 = vadd.f32 %v2717, %v2564
        %v2719 = vadd.f32 %v2718, %v2568
        %v2720 = vadd.f32 %v2719, %v2572
        %v2721 = vadd.f32 %v2720, %v2576
        %v2722 = vadd.f32 %v2721, %v2580
        %v2723 = vrot.slane %v2722, 4
        %v2724 = vadd.f32 %v2722, %v2723
        %v2725 = vrot.slane %v2724, 2
        %v2726 = vadd.f32 %v2724, %v2725
        %v2727 = vrot.slane %v2726, 1
        %v2728 = vadd.f32 %v2726, %v2727
        %v2733 = vcombine.low %v2617, %v2654
        %v2734 = vcombine.low %v2691, %v2728
        %v2736 = vunpack.c.l.s4 1966171168
        %v2737 = vunpack.c.0.s8 %v2736
        %v2738 = vlaneseq
        %v2739 = vshrl.u32 %v2738, 7
        %v2740 = vsub.s32 %v2737, %v2739
        %v2741 = vrot.slane %v2733, %v2740
        %v2743 = vunpack.c.l.s4 1966171168
        %v2744 = vunpack.c.0.s8 %v2743
        %v2745 = vlaneseq
        %v2746 = vshrl.u32 %v2745, 7
        %v2747 = vsub.s32 %v2744, %v2746
        %v2748 = vrot.slane %v2734, %v2747
        %v2749 = vcombine.low %v2741, %v2748
        %v2751 = vunpack.c.l.s4 1966171168
        %v2752 = vunpack.c.0.s8 %v2751
        %v2753 = vlaneseq
        %v2754 = vshrl.u32 %v2753, 7
        %v2755 = vsub.s32 %v2752, %v2754
        %v2756 = vrot.slane %v2749, %v2755
        %v2758 = vadd.f32 %v2196, %v2756
        %2759 = vst.msk [vmem:[#allocation3] sm:$0xf] %vm1906, %v2758
        %p2760 = scmp.eq.s32.totalorder %s14, 1
        // Predicated region
        $region33: #{tpu_custom_call.1} parent=27 // pred_check
          %p2761 = pneg %p2760
        $region34: #{tpu_custom_call.1} parent=27 // pred_check_branch
          %2763 = sbr.rel (%p2761) target = $region36
        $region35: #{tpu_custom_call.1} parent=27 // pred_region
          %v2764 = vld [vmem:[#allocation2] sm:$0xf]
          %v2765 = vmax.f32 %v2764, 1e-30
          %v2766 = vlog2.pop %v2765
          %v2767 = vmul.f32 %v2766, 0.6931472
          %v2768 = vadd.f32 %v2767, 20.0
          %v2769 = vld [vmem:[#allocation3] sm:$0xf]
          %v2770 = vsub.f32 %v2769, %v2768
          %v2771 = vmin.f32 %v2770, 0.0
          %v2772 = vmul.f32 %v2771, 1.442695
          %v2773 = vpow.pop %v2772
          %v2774 = vsub.f32 1.0, %v2773
          %v2775 = vmul.f32 %v2774, -0.25
          %v2776 = vmul.f32 %v2775, %v2774
          %v2777 = vmul.f32 %v2776, %v2771
          %v2779 = vlaneseq
          %v2780 = vshrl.u32 %v2779, 7
          %v2781 = vsub.s32 0, %v2780
          %v2782 = vrot.slane %v2777, %v2781
          %v2783 = vlaneseq
          %v2784 = vshrl.u32 %v2783, 7
          %v2785 = vsub.s32 1, %v2784
          %v2786 = vrot.slane %v2777, %v2785
          %v2787 = vlaneseq
          %v2788 = vshrl.u32 %v2787, 7
          %v2789 = vsub.s32 2, %v2788
          %v2790 = vrot.slane %v2777, %v2789
          %v2791 = vlaneseq
          %v2792 = vshrl.u32 %v2791, 7
          %v2793 = vsub.s32 3, %v2792
          %v2794 = vrot.slane %v2777, %v2793
          %vm2799 = vcmask 1040384
          %v2800 = vsel %vm2799, %v2782, 0.0
          %v2801 = vsel %vm2799, %v2786, 0.0
          %v2802 = vadd.f32 %v2800, %v2801
          %v2803 = vsel %vm2799, %v2790, 0.0
          %v2804 = vadd.f32 %v2802, %v2803
          %v2805 = vsel %vm2799, %v2794, 0.0
          %v2806 = vadd.f32 %v2804, %v2805
          %2807 = vadd.xlane.f32.xlu0 %v2806
          %v2808 = vpop.xlane.xlu0 %2807
          %v2809 = vrot.slane %v2808, 4
          %v2810 = vadd.f32 %v2808, %v2809
          %v2811 = vrot.slane %v2810, 2
          %v2812 = vadd.f32 %v2810, %v2811
          %v2813 = vrot.slane %v2812, 1
          %v2814 = vadd.f32 %v2812, %v2813
          %s2815 = vtos %v2814
          %v2816 = vrcp.pop 512.0
          %s2817 = vtos %v2816
          %s2818 = smul.f32 %s2815, %s2817
          %s2819 = scalar_lea.smem [#allocation4], 0
          %2820 = sst [smem:[%s2819]] %s2818
        $region36: #{tpu_custom_call.1} parent=27 // pred_fallthru
          _
        // Predicated region
        $region37: #{tpu_custom_call.1} parent=27 // pred_check
          %p2821 = pneg %p74
        $region38: #{tpu_custom_call.1} parent=27 // pred_check_branch
          %2823 = sbr.rel (%p2821) target = $region40
        $region39: #{tpu_custom_call.1} parent=27 // pred_region
          %s2825 = ssub.s32 16, 16
          %2826 = vsyncadd [#allocation5], %s2825
          %2829 = dma.smem_to_hbm [#allocation4], 16, %s2, [#allocation5]
        $region40: #{tpu_custom_call.1} parent=27 // pred_fallthru
          _
        // Predicated region
        $region41: #{tpu_custom_call.1} parent=27 // pred_check
          %p2830 = pneg %p74
        $region42: #{tpu_custom_call.1} parent=27 // pred_check_branch
          %2832 = sbr.rel (%p2830) target = $region44
        $region43: #{tpu_custom_call.1} parent=27 // pred_region
          %2833 = dma.done [#allocation5], 16
        $region44: #{tpu_custom_call.1} parent=27 // pred_fallthru
          _
        %2834 = sfence
      $region28: #{tpu_custom_call.1} parent=5 // pred_fallthru
        _
      %p2835 = scmp.le.s32.totalorder 2, %s9
      // Predicated region
      $region45: #{tpu_custom_call.1} parent=5 // pred_check
        %p2836 = pneg %p2835
      $region46: #{tpu_custom_call.1} parent=5 // pred_check_branch
        %2838 = sbr.rel (%p2836) target = $region48
      $region47: #{tpu_custom_call.1} parent=5 // pred_region
        %s2839 = ssub.s32 %s9, 2
      $region48: #{tpu_custom_call.1} parent=5 // pred_fallthru
        _
    $region6: #{tpu_custom_call.1} parent=1 // loop_footer
      %s13 = sadd.s32 1, %s9
    $region7: #{tpu_custom_call.1} parent=1 // loop_footer_branch
      %8 = sbr.rel target = $region3
    $region8: #{tpu_custom_call.1} parent=1 // loop_exit
      _
    %2840 = vsyncpa [#allocation5], 1
    %s2841 = scalar_lea.sflag [#allocation5], 1
    %2842 = vsyncpa %s2841, 1

</llo_original>
